<compile_context>
chip_gen: v6e
topology: v6e:2x2x1
jax: 0.10.0
libtpu: 0.0.40
codegen_flags: <defaults>
</compile_context>

<pallas_src>
import math

import jax
import jax.numpy as jnp
from jax import lax
from jax.experimental import pallas as pl
from jax.experimental.pallas import tpu as pltpu

HIDDEN = 32            # hidden_dim
MEMORY = 32            # memory_size (must equal HIDDEN, see note above)
HEADS = 4
HEAD_DIM = HIDDEN // HEADS
SEQ = 8
BATCH = 2
LN_EPS = 1e-5          # nn.LayerNorm default
NEG_INF = -1e9         # additive cross-batch mask value

assert MEMORY == HIDDEN, "bug-compatible decay broadcast requires memory_size == hidden_dim"
assert HIDDEN % HEADS == 0
assert MEMORY >= SEQ + 1, "output-slab row budget (rows 1..S hold the write gate)"


# ------------------------------ fused kernel --------------------------------
def _fused_kernel(x_ref, mem_ref, p_ref, out_ref):
    B, S, H = x_ref.shape
    M = mem_ref.shape[1]
    BS, BM = B * S, B * M
    R = HEADS * BS                                   # rows of the head-major score matrix
    scale = 1.0 / math.sqrt(H // HEADS)

    # ---- unpack the single parameter slab (static ref slices) -----------------
    wx    = p_ref[0:H, 0:4 * H]                      # [H,4H] = [wq | wo_x | weg | wg_x | 0]
    wm    = p_ref[H:2 * H, 0:2 * H]                  # [H,2H] = [wk | wv]
    woc   = p_ref[H:2 * H, 2 * H:3 * H]              # [H,H]  = wo_c (context half of output_proj)
    vec   = p_ref[H:2 * H, 3 * H:4 * H]              # [H,H]  small vectors, one per row
    hmask = p_ref[0:R, 4 * H:5 * H]                  # [R,H]  per-head feature mask (0/1)
    badd  = p_ref[0:R, 5 * H:5 * H + BM]             # [R,BM] cross-batch additive mask (0/-1e9)

    bq, bk, bv = vec[0:1], vec[1:2], vec[2:3]
    bo, ln_g, ln_b = vec[3:4], vec[4:5], vec[5:6]
    wg_c, beg, decay = vec[6:7], vec[7:8], vec[8:9]
    bwg = vec[9:10, 0:1]                             # write_gate bias (scalar)

    x_all = x_ref[...].reshape(BS, H)                # [B*S, H]
    m_all = mem_ref[...].reshape(BM, H)              # [B*M, H]

    # ---- fused x-side projection: q | output_proj(x-part) | erase logits | gate(x) ----
    xp = jnp.dot(x_all, wx, preferred_element_type=jnp.float32)          # [BS, 4H]
    q_all   = xp[:, 0:H] + bq
    xo_all  = xp[:, H:2 * H]
    eg_rows = xp[:, 2 * H:2 * H + M]                                     # per-row x @ weg
    gx_all  = xp[:, 2 * H + M:2 * H + M + 1] + bwg                       # [BS, 1]

    # ---- memory-side projection: k | v -----------------------------------------
    kv = jnp.dot(m_all, wm, preferred_element_type=jnp.float32)          # [BM, 2H]
    k_all = kv[:, 0:H] + bk
    v_all = kv[:, H:2 * H] + bv

    # ---- erase gate: softmax(mean_s(x) @ weg + beg) over memory slots ----------
    eg = jnp.concatenate(
        [jnp.sum(eg_rows[b * S:(b + 1) * S, :], axis=0, keepdims=True) for b in range(B)],
        axis=0) * (1.0 / S) + beg                                        # [B, M]
    eg = jnp.exp(eg - jnp.max(eg, axis=-1, keepdims=True))
    ww_all = eg * pl.reciprocal(jnp.sum(eg, axis=-1, keepdims=True), approx=True)

    # ---- attention: all batches AND all heads in one matmul --------------------
    # head-major rows: r = h*(B*S) + b*S + s ; q replicated by sublane concat, head
    # feature selection by a shipped 0/1 lane mask (no rep matmul, no iota masks).
    q_rep = jnp.concatenate([q_all] * HEADS, axis=0) * hmask             # [R, H]
    scores = lax.dot_general(q_rep, k_all, (((1,), (1,)), ((), ())),
                             preferred_element_type=jnp.float32) * scale + badd
    scores = scores - jnp.max(scores, axis=-1, keepdims=True)
    e = jnp.exp(scores)
    attn = e * pl.reciprocal(jnp.sum(e, axis=-1, keepdims=True), approx=True)   # [R, BM]
    # attention dropout is identity at inference time

    ctx_full = jnp.dot(attn, v_all, preferred_element_type=jnp.float32)  # [R, H]

    # head reduction / head-mean: contiguous sublane-slice adds (no reshapes)
    ctx = ctx_full[0:BS] * hmask[0:1]
    attn_sum = attn[0:BS]
    for h in range(1, HEADS):
        ctx = ctx + ctx_full[h * BS:(h + 1) * BS] * hmask[h * BS:h * BS + 1]
        attn_sum = attn_sum + attn[h * BS:(h + 1) * BS]
    attn_mean = attn_sum * (1.0 / HEADS)                                 # [BS, BM]

    # ---- output projection (concat-free) + LayerNorm ----------------------------
    o = xo_all + jnp.dot(ctx, woc, preferred_element_type=jnp.float32) + bo
    mu = jnp.mean(o, axis=-1, keepdims=True)
    var = jnp.mean((o - mu) ** 2, axis=-1, keepdims=True)
    y_all = (o - mu) * lax.rsqrt(var + LN_EPS) * ln_g + ln_b             # read_output [BS, H]

    # ---- write gate + memory update ---------------------------------------------
    gate = jax.nn.sigmoid(gx_all + jnp.sum(y_all * wg_c, axis=-1, keepdims=True))  # [BS,1]
    gxw = gate * x_all                                                   # [BS, H]

    wwT = ww_all.T                                                       # [M, B] (column form)
    wt = jnp.concatenate(
        [wwT[:, b:b + 1] * jnp.sum(gxw[b * S:(b + 1) * S, :], axis=0, keepdims=True)
         for b in range(B)], axis=0)                                     # [BM, H] write term
    new_m = m_all * decay + wt            # bug-compatible decay broadcast (needs M == H)
    inv = lax.rsqrt(jnp.maximum(jnp.sum(new_m * new_m, axis=-1, keepdims=True), 1e-24))
    new_mem = new_m * inv * math.sqrt(H)  # F.normalize(., 2, -1) * sqrt(H)   [BM, H]

    # ---- single lane-dense output slab -------------------------------------------
    out_ref[...] = jnp.zeros(out_ref.shape, jnp.float32)
    out_ref[:, 0:M, 0:H] = new_mem.reshape(B, M, H)                      # lanes   0: 32
    out_ref[:, 0:S, H:2 * H] = y_all.reshape(B, S, H)                    # lanes  32: 64
    attn_sel = jnp.concatenate(
        [attn_mean[b * S:(b + 1) * S, b * M:(b + 1) * M] for b in range(B)], axis=0)
    out_ref[:, 0:S, 2 * H:2 * H + M] = attn_sel.reshape(B, S, M)         # lanes  64: 96
    out_ref[:, 0:1, 2 * H + M:2 * H + 2 * M] = ww_all.reshape(B, 1, M)   # lanes  96:128 (row 0)
    out_ref[:, 1:1 + S, 2 * H + M:2 * H + M + 1] = gate.reshape(B, S, 1)  # lane 96, rows 1..S


# -------------------------------- wrapper ------------------------------------
def working_memory_forward(input_data, param_slab, memory=None):
    """mode='read_write' forward pass. Returns (read_output, metadata)."""
    # TODO(synk): optional memory_mask renormalization path and train-time dropout
    # are not implemented (inference, mask=None), matching the default call.
    B, S, H = input_data.shape
    M = MEMORY
    if memory is None or memory.shape[0] != B:
        memory = jnp.zeros((B, M, H), jnp.float32)          # reset_memory()

    vmem = lambda: pl.BlockSpec(memory_space=pltpu.MemorySpace.VMEM)
    slab = pl.pallas_call(
        _fused_kernel,
        out_shape=jax.ShapeDtypeStruct((B, M, 2 * H + 2 * M), jnp.float32),
        in_specs=[vmem(), vmem(), vmem()],
        out_specs=vmem(),
    )(input_data, memory, param_slab)

    new_mem  = slab[:, 0:M, 0:H]                      # [B, M, H]
    read_out = slab[:, 0:S, H:2 * H]                  # [B, S, H]
    attn     = slab[:, 0:S, 2 * H:2 * H + M]          # [B, S, M]
    ww       = slab[:, 0, 2 * H + M:2 * H + 2 * M]    # [B, M]
    gate     = slab[:, 1:1 + S, 2 * H + M]            # [B, S]

    metadata = {
        'read_attention': attn,                       # [B, S, M]
        'write_gate': gate.mean(),                    # scalar
        'write_weights': ww,                          # [B, M]
        'memory_usage': (ww.sum(axis=-1) / M).mean(),  # scalar
        'memory': new_mem,                            # [B, M, H]
    }
    return read_out, metadata


# ------------------------------- parameters ----------------------------------
def init_params(key):
    def xavier(k, shape):
        fan_in, fan_out = shape
        limit = math.sqrt(6.0 / (fan_in + fan_out))
        return jax.random.uniform(k, shape, jnp.float32, -limit, limit)

    ks = jax.random.split(key, 6)
    H, M = HIDDEN, MEMORY
    return {
        'wq': xavier(ks[0], (H, H)),  'bq': jnp.zeros((H,), jnp.float32),
        'wk': xavier(ks[1], (H, H)),  'bk': jnp.zeros((H,), jnp.float32),
        'wv': xavier(ks[2], (H, H)),  'bv': jnp.zeros((H,), jnp.float32),
        'wwg': xavier(ks[3], (2 * H, 1)), 'bwg': jnp.zeros((), jnp.float32),
        'weg': xavier(ks[4], (H, M)), 'beg': jnp.zeros((M,), jnp.float32),
        'wo': xavier(ks[5], (2 * H, H)), 'bo': jnp.zeros((H,), jnp.float32),
        'ln_g': jnp.ones((H,), jnp.float32), 'ln_b': jnp.zeros((H,), jnp.float32),
        'decay': jnp.full((M,), 0.95, jnp.float32),   # memory_decay
    }


def pack_params(p, batch=BATCH, seq=SEQ):
    """One-time host-side packing of all parameters AND the constant head/batch
    masks into a single lane-aligned slab consumed by the fused kernel."""
    H, M, HD = HIDDEN, MEMORY, HEAD_DIM
    R = HEADS * batch * seq
    rows = max(2 * H, R)
    lanes = ((5 * H + batch * M + 127) // 128) * 128
    slab = jnp.zeros((rows, lanes), jnp.float32)

    # rows 0:H  -> fused x-side matrix [wq | wo_x | weg | wg_x]
    wx = jnp.concatenate([p['wq'], p['wo'][:H, :], p['weg'], p['wwg'][:H, :]], axis=1)
    slab = slab.at[0:H, 0:wx.shape[1]].set(wx)
    # rows H:2H -> [wk | wv | wo_c | vecs]
    slab = slab.at[H:2 * H, 0:H].set(p['wk'])
    slab = slab.at[H:2 * H, H:2 * H].set(p['wv'])
    slab = slab.at[H:2 * H, 2 * H:3 * H].set(p['wo'][H:, :])
    bwg_row = jnp.zeros((H,), jnp.float32).at[0].set(p['bwg'])
    vec = jnp.stack([p['bq'], p['bk'], p['bv'], p['bo'], p['ln_g'], p['ln_b'],
                     p['wwg'][H:, 0], p['beg'], p['decay'], bwg_row], axis=0)
    slab = slab.at[H:H + vec.shape[0], 3 * H:4 * H].set(vec)

    # constant masks (head-major rows: r = h*(batch*seq) + b*seq + s)
    r = jnp.arange(R)
    head = r // (batch * seq)
    rb = (r % (batch * seq)) // seq
    hmask = (jnp.arange(H)[None, :] // HD == head[:, None]).astype(jnp.float32)
    badd = jnp.where(rb[:, None] == (jnp.arange(batch * M)[None, :] // M),
                     0.0, NEG_INF).astype(jnp.float32)
    slab = slab.at[0:R, 4 * H:5 * H].set(hmask)
    slab = slab.at[0:R, 5 * H:5 * H + batch * M].set(badd)
    return slab


if __name__ == "__main__":
    key = jax.random.PRNGKey(0)
    pkey, xkey = jax.random.split(key)
    params = init_params(pkey)
    slab = pack_params(params)
    x = jax.random.normal(xkey, (BATCH, SEQ, HIDDEN), jnp.float32)

    fwd = jax.jit(working_memory_forward)
    read_out, meta = fwd(x, slab)
    jax.block_until_ready(read_out)
    jax.block_until_ready(meta['memory'])

    assert read_out.shape == (BATCH, SEQ, HIDDEN)
    assert meta['read_attention'].shape == (BATCH, SEQ, MEMORY)
    assert meta['write_weights'].shape == (BATCH, MEMORY)
    assert meta['memory'].shape == (BATCH, MEMORY, HIDDEN)
    assert bool(jnp.all(jnp.isfinite(read_out)))
    assert bool(jnp.all(jnp.isfinite(meta['memory'])))
    assert bool(jnp.isfinite(meta['write_gate']))
    assert bool(jnp.isfinite(meta['memory_usage']))
    # softmax rows (mean over heads / erase gate) must sum to ~1
    assert bool(jnp.allclose(jnp.sum(meta['read_attention'], axis=-1), 1.0, atol=1e-2))
    assert bool(jnp.allclose(jnp.sum(meta['write_weights'], axis=-1), 1.0, atol=1e-2))

    print("KERNEL_OK")
</pallas_src>

<mosaic_0001>
module attributes {stable_mosaic.version = 11 : i64} {
  func.func @_fused_kernel(%arg0: memref<2x8x32xf32, #tpu.memory_space<vmem>>, %arg1: memref<2x32x32xf32, #tpu.memory_space<vmem>>, %arg2: memref<64x256xf32, #tpu.memory_space<vmem>>, %arg3: memref<2x32x128xf32, #tpu.memory_space<vmem>>) attributes {dimension_semantics = [], scalar_prefetch = 0 : i64, scratch_operands = 0 : i64, tpu.core_type = #tpu.core_type<tc>} {
    %c0 = arith.constant 0 : index
    %c0_0 = arith.constant 0 : index
    %0 = vector.load %arg2[%c0, %c0_0] : memref<64x256xf32, #tpu.memory_space<vmem>>, vector<32x128xf32>
    %c32 = arith.constant 32 : index
    %c0_1 = arith.constant 0 : index
    %1 = vector.load %arg2[%c32, %c0_1] : memref<64x256xf32, #tpu.memory_space<vmem>>, vector<32x64xf32>
    %c32_2 = arith.constant 32 : index
    %c64 = arith.constant 64 : index
    %2 = vector.load %arg2[%c32_2, %c64] : memref<64x256xf32, #tpu.memory_space<vmem>>, vector<32x32xf32>
    %c32_3 = arith.constant 32 : index
    %c96 = arith.constant 96 : index
    %3 = vector.load %arg2[%c32_3, %c96] : memref<64x256xf32, #tpu.memory_space<vmem>>, vector<32x32xf32>
    %c0_4 = arith.constant 0 : index
    %c128 = arith.constant 128 : index
    %4 = vector.load %arg2[%c0_4, %c128] : memref<64x256xf32, #tpu.memory_space<vmem>>, vector<64x32xf32>
    %c0_5 = arith.constant 0 : index
    %c160 = arith.constant 160 : index
    %5 = vector.load %arg2[%c0_5, %c160] : memref<64x256xf32, #tpu.memory_space<vmem>>, vector<64x64xf32>
    %6 = vector.extract_strided_slice %3 {offsets = [0, 0], sizes = [1, 32], strides = [1, 1]} : vector<32x32xf32> to vector<1x32xf32>
    %7 = vector.extract_strided_slice %3 {offsets = [1, 0], sizes = [1, 32], strides = [1, 1]} : vector<32x32xf32> to vector<1x32xf32>
    %8 = vector.extract_strided_slice %3 {offsets = [2, 0], sizes = [1, 32], strides = [1, 1]} : vector<32x32xf32> to vector<1x32xf32>
    %9 = vector.extract_strided_slice %3 {offsets = [3, 0], sizes = [1, 32], strides = [1, 1]} : vector<32x32xf32> to vector<1x32xf32>
    %10 = vector.extract_strided_slice %3 {offsets = [4, 0], sizes = [1, 32], strides = [1, 1]} : vector<32x32xf32> to vector<1x32xf32>
    %11 = vector.extract_strided_slice %3 {offsets = [5, 0], sizes = [1, 32], strides = [1, 1]} : vector<32x32xf32> to vector<1x32xf32>
    %12 = vector.extract_strided_slice %3 {offsets = [6, 0], sizes = [1, 32], strides = [1, 1]} : vector<32x32xf32> to vector<1x32xf32>
    %13 = vector.extract_strided_slice %3 {offsets = [7, 0], sizes = [1, 32], strides = [1, 1]} : vector<32x32xf32> to vector<1x32xf32>
    %14 = vector.extract_strided_slice %3 {offsets = [8, 0], sizes = [1, 32], strides = [1, 1]} : vector<32x32xf32> to vector<1x32xf32>
    %15 = vector.extract_strided_slice %3 {offsets = [9, 0], sizes = [1, 1], strides = [1, 1]} : vector<32x32xf32> to vector<1x1xf32>
    %c0_6 = arith.constant 0 : index
    %c0_7 = arith.constant 0 : index
    %c0_8 = arith.constant 0 : index
    %16 = vector.load %arg0[%c0_6, %c0_7, %c0_8] : memref<2x8x32xf32, #tpu.memory_space<vmem>>, vector<2x8x32xf32>
    %17 = vector.shape_cast %16 : vector<2x8x32xf32> to vector<16x32xf32>
    %c0_9 = arith.constant 0 : index
    %c0_10 = arith.constant 0 : index
    %c0_11 = arith.constant 0 : index
    %18 = vector.load %arg1[%c0_9, %c0_10, %c0_11] : memref<2x32x32xf32, #tpu.memory_space<vmem>>, vector<2x32x32xf32>
    %19 = vector.shape_cast %18 : vector<2x32x32xf32> to vector<64x32xf32>
    %cst = arith.constant dense<0.000000e+00> : vector<16x128xf32>
    %20 = tpu.matmul %17, %0, %cst {dimension_numbers = #tpu.dot_dimension_numbers<[1], [0], [0], [1], [0, 0, 1, 1], [], []>} : vector<16x32xf32>, vector<32x128xf32>, vector<16x128xf32> -> vector<16x128xf32>
    %21 = vector.extract_strided_slice %20 {offsets = [0, 0], sizes = [16, 32], strides = [1, 1]} : vector<16x128xf32> to vector<16x32xf32>
    %22 = vector.broadcast %6 : vector<1x32xf32> to vector<16x32xf32>
    %23 = arith.addf %21, %22 : vector<16x32xf32>
    %24 = vector.extract_strided_slice %20 {offsets = [0, 32], sizes = [16, 32], strides = [1, 1]} : vector<16x128xf32> to vector<16x32xf32>
    %25 = vector.extract_strided_slice %20 {offsets = [0, 64], sizes = [16, 32], strides = [1, 1]} : vector<16x128xf32> to vector<16x32xf32>
    %26 = vector.extract_strided_slice %20 {offsets = [0, 96], sizes = [16, 1], strides = [1, 1]} : vector<16x128xf32> to vector<16x1xf32>
    %27 = vector.broadcast %15 : vector<1x1xf32> to vector<16x1xf32>
    %28 = arith.addf %26, %27 : vector<16x1xf32>
    %cst_12 = arith.constant dense<0.000000e+00> : vector<64x64xf32>
    %29 = tpu.matmul %19, %1, %cst_12 {dimension_numbers = #tpu.dot_dimension_numbers<[1], [0], [0], [1], [0, 0, 1, 1], [], []>} : vector<64x32xf32>, vector<32x64xf32>, vector<64x64xf32> -> vector<64x64xf32>
    %30 = vector.extract_strided_slice %29 {offsets = [0, 0], sizes = [64, 32], strides = [1, 1]} : vector<64x64xf32> to vector<64x32xf32>
    %31 = vector.broadcast %7 : vector<1x32xf32> to vector<64x32xf32>
    %32 = arith.addf %30, %31 : vector<64x32xf32>
    %33 = vector.extract_strided_slice %29 {offsets = [0, 32], sizes = [64, 32], strides = [1, 1]} : vector<64x64xf32> to vector<64x32xf32>
    %34 = vector.broadcast %8 : vector<1x32xf32> to vector<64x32xf32>
    %35 = arith.addf %33, %34 : vector<64x32xf32>
    %36 = vector.extract_strided_slice %25 {offsets = [0, 0], sizes = [8, 32], strides = [1, 1]} : vector<16x32xf32> to vector<8x32xf32>
    %cst_13 = arith.constant dense<0.000000e+00> : vector<32xf32>
    %37 = vector.multi_reduction <add>, %36, %cst_13 [0] : vector<8x32xf32> to vector<32xf32>
    %38 = vector.shape_cast %37 : vector<32xf32> to vector<1x32xf32>
    %39 = vector.extract_strided_slice %25 {offsets = [8, 0], sizes = [8, 32], strides = [1, 1]} : vector<16x32xf32> to vector<8x32xf32>
    %cst_14 = arith.constant dense<0.000000e+00> : vector<32xf32>
    %40 = vector.multi_reduction <add>, %39, %cst_14 [0] : vector<8x32xf32> to vector<32xf32>
    %41 = vector.shape_cast %40 : vector<32xf32> to vector<1x32xf32>
    %42 = tpu.concatenate %38, %41 in 0 : vector<1x32xf32>, vector<1x32xf32> -> vector<2x32xf32>
    %cst_15 = arith.constant 1.250000e-01 : f32
    %43 = vector.broadcast %cst_15 : f32 to vector<2x32xf32>
    %44 = arith.mulf %42, %43 : vector<2x32xf32>
    %45 = vector.broadcast %13 : vector<1x32xf32> to vector<2x32xf32>
    %46 = arith.addf %44, %45 : vector<2x32xf32>
    %cst_16 = arith.constant dense<0xFF800000> : vector<2xf32>
    %47 = vector.multi_reduction <maximumf>, %46, %cst_16 [1] : vector<2x32xf32> to vector<2xf32>
    %48 = vector.shape_cast %47 : vector<2xf32> to vector<2x1xf32>
    %49 = vector.broadcast %48 : vector<2x1xf32> to vector<2x32xf32>
    %50 = arith.subf %46, %49 : vector<2x32xf32>
    %51 = math.exp %50 : vector<2x32xf32>
    %cst_17 = arith.constant dense<0.000000e+00> : vector<2xf32>
    %52 = vector.multi_reduction <add>, %51, %cst_17 [1] : vector<2x32xf32> to vector<2xf32>
    %53 = vector.shape_cast %52 : vector<2xf32> to vector<2x1xf32>
    %54 = tpu.reciprocal %53 {approx = true} : vector<2x1xf32> -> vector<2x1xf32>
    %55 = vector.broadcast %54 : vector<2x1xf32> to vector<2x32xf32>
    %56 = arith.mulf %51, %55 : vector<2x32xf32>
    %57 = tpu.concatenate %23, %23, %23, %23 in 0 : vector<16x32xf32>, vector<16x32xf32>, vector<16x32xf32>, vector<16x32xf32> -> vector<64x32xf32>
    %58 = arith.mulf %57, %4 : vector<64x32xf32>
    %cst_18 = arith.constant dense<0.000000e+00> : vector<64x64xf32>
    %59 = tpu.matmul %58, %32, %cst_18 {dimension_numbers = #tpu.dot_dimension_numbers<[1], [1], [0], [0], [0, 0, 1, 0], [], []>} : vector<64x32xf32>, vector<64x32xf32>, vector<64x64xf32> -> vector<64x64xf32>
    %cst_19 = arith.constant 0.353553385 : f32
    %60 = vector.broadcast %cst_19 : f32 to vector<64x64xf32>
    %61 = arith.mulf %59, %60 : vector<64x64xf32>
    %62 = arith.addf %61, %5 : vector<64x64xf32>
    %cst_20 = arith.constant dense<0xFF800000> : vector<64xf32>
    %63 = vector.multi_reduction <maximumf>, %62, %cst_20 [1] : vector<64x64xf32> to vector<64xf32>
    %64 = vector.shape_cast %63 : vector<64xf32> to vector<64x1xf32>
    %65 = vector.broadcast %64 : vector<64x1xf32> to vector<64x64xf32>
    %66 = arith.subf %62, %65 : vector<64x64xf32>
    %67 = math.exp %66 : vector<64x64xf32>
    %cst_21 = arith.constant dense<0.000000e+00> : vector<64xf32>
    %68 = vector.multi_reduction <add>, %67, %cst_21 [1] : vector<64x64xf32> to vector<64xf32>
    %69 = vector.shape_cast %68 : vector<64xf32> to vector<64x1xf32>
    %70 = tpu.reciprocal %69 {approx = true} : vector<64x1xf32> -> vector<64x1xf32>
    %71 = vector.broadcast %70 : vector<64x1xf32> to vector<64x64xf32>
    %72 = arith.mulf %67, %71 : vector<64x64xf32>
    %cst_22 = arith.constant dense<0.000000e+00> : vector<64x32xf32>
    %73 = tpu.matmul %72, %35, %cst_22 {dimension_numbers = #tpu.dot_dimension_numbers<[1], [0], [0], [1], [0, 0, 1, 1], [], []>} : vector<64x64xf32>, vector<64x32xf32>, vector<64x32xf32> -> vector<64x32xf32>
    %74 = vector.extract_strided_slice %73 {offsets = [0, 0], sizes = [16, 32], strides = [1, 1]} : vector<64x32xf32> to vector<16x32xf32>
    %75 = vector.extract_strided_slice %4 {offsets = [0, 0], sizes = [1, 32], strides = [1, 1]} : vector<64x32xf32> to vector<1x32xf32>
    %76 = vector.broadcast %75 : vector<1x32xf32> to vector<16x32xf32>
    %77 = arith.mulf %74, %76 : vector<16x32xf32>
    %78 = vector.extract_strided_slice %72 {offsets = [0, 0], sizes = [16, 64], strides = [1, 1]} : vector<64x64xf32> to vector<16x64xf32>
    %79 = vector.extract_strided_slice %73 {offsets = [16, 0], sizes = [16, 32], strides = [1, 1]} : vector<64x32xf32> to vector<16x32xf32>
    %80 = vector.extract_strided_slice %4 {offsets = [16, 0], sizes = [1, 32], strides = [1, 1]} : vector<64x32xf32> to vector<1x32xf32>
    %81 = vector.broadcast %80 : vector<1x32xf32> to vector<16x32xf32>
    %82 = arith.mulf %79, %81 : vector<16x32xf32>
    %83 = arith.addf %77, %82 : vector<16x32xf32>
    %84 = vector.extract_strided_slice %72 {offsets = [16, 0], sizes = [16, 64], strides = [1, 1]} : vector<64x64xf32> to vector<16x64xf32>
    %85 = arith.addf %78, %84 : vector<16x64xf32>
    %86 = vector.extract_strided_slice %73 {offsets = [32, 0], sizes = [16, 32], strides = [1, 1]} : vector<64x32xf32> to vector<16x32xf32>
    %87 = vector.extract_strided_slice %4 {offsets = [32, 0], sizes = [1, 32], strides = [1, 1]} : vector<64x32xf32> to vector<1x32xf32>
    %88 = vector.broadcast %87 : vector<1x32xf32> to vector<16x32xf32>
    %89 = arith.mulf %86, %88 : vector<16x32xf32>
    %90 = arith.addf %83, %89 : vector<16x32xf32>
    %91 = vector.extract_strided_slice %72 {offsets = [32, 0], sizes = [16, 64], strides = [1, 1]} : vector<64x64xf32> to vector<16x64xf32>
    %92 = arith.addf %85, %91 : vector<16x64xf32>
    %93 = vector.extract_strided_slice %73 {offsets = [48, 0], sizes = [16, 32], strides = [1, 1]} : vector<64x32xf32> to vector<16x32xf32>
    %94 = vector.extract_strided_slice %4 {offsets = [48, 0], sizes = [1, 32], strides = [1, 1]} : vector<64x32xf32> to vector<1x32xf32>
    %95 = vector.broadcast %94 : vector<1x32xf32> to vector<16x32xf32>
    %96 = arith.mulf %93, %95 : vector<16x32xf32>
    %97 = arith.addf %90, %96 : vector<16x32xf32>
    %98 = vector.extract_strided_slice %72 {offsets = [48, 0], sizes = [16, 64], strides = [1, 1]} : vector<64x64xf32> to vector<16x64xf32>
    %99 = arith.addf %92, %98 : vector<16x64xf32>
    %cst_23 = arith.constant 2.500000e-01 : f32
    %100 = vector.broadcast %cst_23 : f32 to vector<16x64xf32>
    %101 = arith.mulf %99, %100 : vector<16x64xf32>
    %cst_24 = arith.constant dense<0.000000e+00> : vector<16x32xf32>
    %102 = tpu.matmul %97, %2, %cst_24 {dimension_numbers = #tpu.dot_dimension_numbers<[1], [0], [0], [1], [0, 0, 1, 1], [], []>} : vector<16x32xf32>, vector<32x32xf32>, vector<16x32xf32> -> vector<16x32xf32>
    %103 = arith.addf %24, %102 : vector<16x32xf32>
    %104 = vector.broadcast %9 : vector<1x32xf32> to vector<16x32xf32>
    %105 = arith.addf %103, %104 : vector<16x32xf32>
    %cst_25 = arith.constant dense<0.000000e+00> : vector<16xf32>
    %106 = vector.multi_reduction <add>, %105, %cst_25 [1] : vector<16x32xf32> to vector<16xf32>
    %107 = vector.shape_cast %106 : vector<16xf32> to vector<16x1xf32>
    %cst_26 = arith.constant 3.200000e+01 : f32
    %108 = vector.broadcast %cst_26 : f32 to vector<16x1xf32>
    %109 = arith.divf %107, %108 : vector<16x1xf32>
    %110 = vector.broadcast %109 : vector<16x1xf32> to vector<16x32xf32>
    %111 = arith.subf %105, %110 : vector<16x32xf32>
    %112 = arith.mulf %111, %111 : vector<16x32xf32>
    %cst_27 = arith.constant dense<0.000000e+00> : vector<16xf32>
    %113 = vector.multi_reduction <add>, %112, %cst_27 [1] : vector<16x32xf32> to vector<16xf32>
    %114 = vector.shape_cast %113 : vector<16xf32> to vector<16x1xf32>
    %cst_28 = arith.constant 3.200000e+01 : f32
    %115 = vector.broadcast %cst_28 : f32 to vector<16x1xf32>
    %116 = arith.divf %114, %115 : vector<16x1xf32>
    %117 = vector.broadcast %109 : vector<16x1xf32> to vector<16x32xf32>
    %118 = arith.subf %105, %117 : vector<16x32xf32>
    %cst_29 = arith.constant 9.99999974E-6 : f32
    %119 = vector.broadcast %cst_29 : f32 to vector<16x1xf32>
    %120 = arith.addf %116, %119 : vector<16x1xf32>
    %121 = math.rsqrt %120 : vector<16x1xf32>
    %122 = vector.broadcast %121 : vector<16x1xf32> to vector<16x32xf32>
    %123 = arith.mulf %118, %122 : vector<16x32xf32>
    %124 = vector.broadcast %10 : vector<1x32xf32> to vector<16x32xf32>
    %125 = arith.mulf %123, %124 : vector<16x32xf32>
    %126 = vector.broadcast %11 : vector<1x32xf32> to vector<16x32xf32>
    %127 = arith.addf %125, %126 : vector<16x32xf32>
    %128 = vector.broadcast %12 : vector<1x32xf32> to vector<16x32xf32>
    %129 = arith.mulf %127, %128 : vector<16x32xf32>
    %cst_30 = arith.constant dense<0.000000e+00> : vector<16xf32>
    %130 = vector.multi_reduction <add>, %129, %cst_30 [1] : vector<16x32xf32> to vector<16xf32>
    %131 = vector.shape_cast %130 : vector<16xf32> to vector<16x1xf32>
    %132 = arith.addf %28, %131 : vector<16x1xf32>
    %133 = arith.negf %132 : vector<16x1xf32>
    %134 = math.exp %133 : vector<16x1xf32>
    %cst_31 = arith.constant 1.000000e+00 : f32
    %135 = vector.broadcast %cst_31 : f32 to vector<16x1xf32>
    %136 = arith.addf %135, %134 : vector<16x1xf32>
    %137 = arith.divf %135, %136 : vector<16x1xf32>
    %138 = vector.broadcast %137 : vector<16x1xf32> to vector<16x32xf32>
    %139 = arith.mulf %138, %17 : vector<16x32xf32>
    %140 = tpu.transpose %56, [1, 0] : vector<2x32xf32> -> vector<32x2xf32>
    %141 = vector.extract_strided_slice %140 {offsets = [0, 0], sizes = [32, 1], strides = [1, 1]} : vector<32x2xf32> to vector<32x1xf32>
    %142 = vector.extract_strided_slice %139 {offsets = [0, 0], sizes = [8, 32], strides = [1, 1]} : vector<16x32xf32> to vector<8x32xf32>
    %cst_32 = arith.constant dense<0.000000e+00> : vector<32xf32>
    %143 = vector.multi_reduction <add>, %142, %cst_32 [0] : vector<8x32xf32> to vector<32xf32>
    %144 = vector.shape_cast %143 : vector<32xf32> to vector<1x32xf32>
    %145 = vector.broadcast %141 : vector<32x1xf32> to vector<32x32xf32>
    %146 = vector.broadcast %144 : vector<1x32xf32> to vector<32x32xf32>
    %147 = arith.mulf %145, %146 : vector<32x32xf32>
    %148 = vector.extract_strided_slice %140 {offsets = [0, 1], sizes = [32, 1], strides = [1, 1]} : vector<32x2xf32> to vector<32x1xf32>
    %149 = vector.extract_strided_slice %139 {offsets = [8, 0], sizes = [8, 32], strides = [1, 1]} : vector<16x32xf32> to vector<8x32xf32>
    %cst_33 = arith.constant dense<0.000000e+00> : vector<32xf32>
    %150 = vector.multi_reduction <add>, %149, %cst_33 [0] : vector<8x32xf32> to vector<32xf32>
    %151 = vector.shape_cast %150 : vector<32xf32> to vector<1x32xf32>
    %152 = vector.broadcast %148 : vector<32x1xf32> to vector<32x32xf32>
    %153 = vector.broadcast %151 : vector<1x32xf32> to vector<32x32xf32>
    %154 = arith.mulf %152, %153 : vector<32x32xf32>
    %155 = tpu.concatenate %147, %154 in 0 : vector<32x32xf32>, vector<32x32xf32> -> vector<64x32xf32>
    %156 = vector.broadcast %14 : vector<1x32xf32> to vector<64x32xf32>
    %157 = arith.mulf %19, %156 : vector<64x32xf32>
    %158 = arith.addf %157, %155 : vector<64x32xf32>
    %159 = arith.mulf %158, %158 : vector<64x32xf32>
    %cst_34 = arith.constant dense<0.000000e+00> : vector<64xf32>
    %160 = vector.multi_reduction <add>, %159, %cst_34 [1] : vector<64x32xf32> to vector<64xf32>
    %161 = vector.shape_cast %160 : vector<64xf32> to vector<64x1xf32>
    %cst_35 = arith.constant 1.000000e-24 : f32
    %162 = vector.broadcast %cst_35 : f32 to vector<64x1xf32>
    %163 = arith.maximumf %161, %162 : vector<64x1xf32>
    %164 = math.rsqrt %163 : vector<64x1xf32>
    %165 = vector.broadcast %164 : vector<64x1xf32> to vector<64x32xf32>
    %166 = arith.mulf %158, %165 : vector<64x32xf32>
    %cst_36 = arith.constant 5.65685415 : f32
    %167 = vector.broadcast %cst_36 : f32 to vector<64x32xf32>
    %168 = arith.mulf %166, %167 : vector<64x32xf32>
    %cst_37 = arith.constant 0.000000e+00 : f32
    %169 = vector.broadcast %cst_37 : f32 to vector<2x32x128xf32>
    %c0_38 = arith.constant 0 : index
    %c0_39 = arith.constant 0 : index
    %c0_40 = arith.constant 0 : index
    %170 = vector.load %arg3[%c0_38, %c0_39, %c0_40] : memref<2x32x128xf32, #tpu.memory_space<vmem>>, vector<2x32x128xf32>
    tpu.vector_store %arg3[%c0_38, %c0_39, %c0_40], %169 {strides = array<i32>} : memref<2x32x128xf32, #tpu.memory_space<vmem>>, vector<2x32x128xf32>,
    %171 = vector.shape_cast %168 : vector<64x32xf32> to vector<2x32x32xf32>
    %c0_41 = arith.constant 0 : index
    %c0_42 = arith.constant 0 : index
    %c0_43 = arith.constant 0 : index
    %172 = vector.load %arg3[%c0_41, %c0_42, %c0_43] : memref<2x32x128xf32, #tpu.memory_space<vmem>>, vector<2x32x32xf32>
    tpu.vector_store %arg3[%c0_41, %c0_42, %c0_43], %171 {strides = array<i32>} : memref<2x32x128xf32, #tpu.memory_space<vmem>>, vector<2x32x32xf32>,
    %173 = vector.shape_cast %127 : vector<16x32xf32> to vector<2x8x32xf32>
    %c0_44 = arith.constant 0 : index
    %c0_45 = arith.constant 0 : index
    %c32_46 = arith.constant 32 : index
    %174 = vector.load %arg3[%c0_44, %c0_45, %c32_46] : memref<2x32x128xf32, #tpu.memory_space<vmem>>, vector<2x8x32xf32>
    tpu.vector_store %arg3[%c0_44, %c0_45, %c32_46], %173 {strides = array<i32>} : memref<2x32x128xf32, #tpu.memory_space<vmem>>, vector<2x8x32xf32>,
    %175 = vector.extract_strided_slice %101 {offsets = [0, 0], sizes = [8, 32], strides = [1, 1]} : vector<16x64xf32> to vector<8x32xf32>
    %176 = vector.extract_strided_slice %101 {offsets = [8, 32], sizes = [8, 32], strides = [1, 1]} : vector<16x64xf32> to vector<8x32xf32>
    %177 = tpu.concatenate %175, %176 in 0 : vector<8x32xf32>, vector<8x32xf32> -> vector<16x32xf32>
    %178 = vector.shape_cast %177 : vector<16x32xf32> to vector<2x8x32xf32>
    %c0_47 = arith.constant 0 : index
    %c0_48 = arith.constant 0 : index
    %c64_49 = arith.constant 64 : index
    %179 = vector.load %arg3[%c0_47, %c0_48, %c64_49] : memref<2x32x128xf32, #tpu.memory_space<vmem>>, vector<2x8x32xf32>
    tpu.vector_store %arg3[%c0_47, %c0_48, %c64_49], %178 {strides = array<i32>} : memref<2x32x128xf32, #tpu.memory_space<vmem>>, vector<2x8x32xf32>,
    %180 = vector.shape_cast %56 : vector<2x32xf32> to vector<2x1x32xf32>
    %c0_50 = arith.constant 0 : index
    %c0_51 = arith.constant 0 : index
    %c96_52 = arith.constant 96 : index
    %181 = vector.load %arg3[%c0_50, %c0_51, %c96_52] : memref<2x32x128xf32, #tpu.memory_space<vmem>>, vector<2x1x32xf32>
    tpu.vector_store %arg3[%c0_50, %c0_51, %c96_52], %180 {strides = array<i32>} : memref<2x32x128xf32, #tpu.memory_space<vmem>>, vector<2x1x32xf32>,
    %182 = vector.shape_cast %137 : vector<16x1xf32> to vector<2x8x1xf32>
    %c0_53 = arith.constant 0 : index
    %c1 = arith.constant 1 : index
    %c96_54 = arith.constant 96 : index
    %183 = vector.load %arg3[%c0_53, %c1, %c96_54] : memref<2x32x128xf32, #tpu.memory_space<vmem>>, vector<2x8x1xf32>
    tpu.vector_store %arg3[%c0_53, %c1, %c96_54], %182 {strides = array<i32>} : memref<2x32x128xf32, #tpu.memory_space<vmem>>, vector<2x8x1xf32>,
    return
  }
}

</mosaic_0001>

<llo_original>
// kernel: working_memory_forward.1
$region0: #{working_memory_forward.1}
  #allocation0 [shape = 'u32[]', space=smem, size = 0x4, offset = 0x4, fixed_abs, tag = 'smem constant byte address 0x4 - core index']
  #allocation1 [shape = 'u32[144,128]{1,0:T(1,128)}', space=vmem, size = 0x12000, scoped, tag = 'internal scratch']
  %s0 = inlined_call_operand.vmem [shape: f32[2,8,32], index: 0, kind: input, shape index: {}]
  %s1 = inlined_call_operand.vmem [shape: f32[2,32,32], index: 1, kind: input, shape index: {}]
  %s2 = inlined_call_operand.hbm [shape: f32[64,256], index: 2, kind: input, shape index: {}]
  %s3 = inlined_call_operand.vmem [shape: f32[2,32,128], index: 3, kind: output, shape index: {}]
  %s4 = sld [smem:[#allocation0]]
  $region26: #{working_memory_forward.1} parent=0
    _
  %s6 = ssub.s32 1, %s4
  %s7 = scalar_select 0, %s6, %s4
  $region1: #{working_memory_forward.1} parent=0
    #allocation2 [shape = 'u8[65536]{0}', space=vmem, size = 0x10000, scoped, tag = 'input window, operand 2, single buffered']
    #allocation3 [shape = 's32[1]{0}', space=sflag, size = 0x4, scoped, tag = 'scoped memory for working_memory_forward.1']
    %8 = vsyncpa [#allocation3], 0
    // Predicated region
    $region2: #{working_memory_forward.1} parent=1 // pred_check
      _
    $region3: #{working_memory_forward.1} parent=1 // pred_check_branch
      %10 = sbr.rel (0) target = $region5
    $region4: #{working_memory_forward.1} parent=1 // pred_region
      _
    $region5: #{working_memory_forward.1} parent=1 // pred_fallthru
      _
    // Predicated region
    $region6: #{working_memory_forward.1} parent=1 // pred_check
      _
    $region7: #{working_memory_forward.1} parent=1 // pred_check_branch
      %12 = sbr.rel (0) target = $region9
    $region8: #{working_memory_forward.1} parent=1 // pred_region
      _
    $region9: #{working_memory_forward.1} parent=1 // pred_fallthru
      _
    // Predicated region
    $region10: #{working_memory_forward.1} parent=1 // pred_check
      _
    $region11: #{working_memory_forward.1} parent=1 // pred_check_branch
      %14 = sbr.rel (0) target = $region13
    $region12: #{working_memory_forward.1} parent=1 // pred_region
      %s16 = ssub.s32 2048, 2048
      %17 = vsyncadd [#allocation3], %s16
      %s18 = sshll.u32 [#allocation2], 4
      %s19 = int_to_ptr.vmem [resolvable:$true] %s18
      %24 = dma.hbm_to_vmem [thread:$0]  %s2, 2048, %s19, [#allocation3], 256, 256, 16
    $region13: #{working_memory_forward.1} parent=1 // pred_fallthru
      _
    // Predicated region
    $region14: #{working_memory_forward.1} parent=1 // pred_check
      _
    $region15: #{working_memory_forward.1} parent=1 // pred_check_branch
      %26 = sbr.rel (0) target = $region17
    $region16: #{working_memory_forward.1} parent=1 // pred_region
      %27 = dma.done [#allocation3], 2048
    $region17: #{working_memory_forward.1} parent=1 // pred_fallthru
      _
    %v28 = vld [vmem:[#allocation2] sm:$0xff]
    %v29 = vld [vmem:[#allocation2 + $0x10] sm:$0xff]
    %v30 = vld [vmem:[#allocation2 + $0x20] sm:$0xff]
    %v31 = vld [vmem:[#allocation2 + $0x30] sm:$0xff]
    %v32 = vld [vmem:[#allocation2 + $0x40] sm:$0xff]
    %v33 = vld [vmem:[#allocation2 + $0x50] sm:$0xff]
    %v34 = vld [vmem:[#allocation2 + $0x60] sm:$0xff]
    %v35 = vld [vmem:[#allocation2 + $0x70] sm:$0xff]
    %v36 = vld [vmem:[#allocation2 + $0x8] sm:$0xff]
    %v37 = vld [vmem:[#allocation2 + $0x18] sm:$0xff]
    %v38 = vld [vmem:[#allocation2 + $0x28] sm:$0xff]
    %v39 = vld [vmem:[#allocation2 + $0x38] sm:$0xff]
    %v40 = vld [vmem:[#allocation2 + $0x48] sm:$0xff]
    %v41 = vld [vmem:[#allocation2 + $0x58] sm:$0xff]
    %v42 = vld [vmem:[#allocation2 + $0x68] sm:$0xff]
    %v43 = vld [vmem:[#allocation2 + $0x78] sm:$0xff]
    %v44 = vld [vmem:[%s0] sm:$0xff]
    %v45 = vld [vmem:[%s0 + $0x8] sm:$0xff]
    %v46 = vld [vmem:[%s1] sm:$0xff]
    %v47 = vld [vmem:[%s1 + $0x8] sm:$0xff]
    %v48 = vld [vmem:[%s1 + $0x10] sm:$0xff]
    %v49 = vld [vmem:[%s1 + $0x18] sm:$0xff]
    %v50 = vld [vmem:[%s1 + $0x20] sm:$0xff]
    %v51 = vld [vmem:[%s1 + $0x28] sm:$0xff]
    %v52 = vld [vmem:[%s1 + $0x30] sm:$0xff]
    %v53 = vld [vmem:[%s1 + $0x38] sm:$0xff]
    %vm54 = vcmask 261120
    %v56 = vsel %vm54, %v44, 0
    %v59 = vsel %vm54, %v45, 0
    %61 = vmatprep.subr.mxu0 0.0
    %62 = vmatpush1.msra.mxu0 0.0
    %63 = vmatprep.subr.mxu0 0.0
    %64 = vmatpush1.msra.mxu0 0.0
    %65 = vmatprep.subr.mxu0 0.0
    %66 = vmatpush1.msra.mxu0 0.0
    %67 = vmatprep.subr.mxu0 0.0
    %68 = vmatpush1.msra.mxu0 0.0
    %69 = vmatprep.subr.mxu0 0.0
    %70 = vmatpush1.msra.mxu0 0.0
    %71 = vmatprep.subr.mxu0 0.0
    %72 = vmatpush1.msra.mxu0 0.0
    %73 = vmatprep.subr.mxu0 0.0
    %74 = vmatpush1.msra.mxu0 0.0
    %75 = vmatprep.subr.mxu0 0.0
    %76 = vmatpush1.msra.mxu0 0.0
    %77 = vmatprep.subr.mxu0 0.0
    %78 = vmatpush1.msra.mxu0 0.0
    %79 = vmatprep.subr.mxu0 0.0
    %80 = vmatpush1.msra.mxu0 0.0
    %81 = vmatprep.subr.mxu0 0.0
    %82 = vmatpush1.msra.mxu0 0.0
    %83 = vmatprep.subr.mxu0 0.0
    %84 = vmatpush1.msra.mxu0 0.0
    %85 = vmatprep.subr.mxu0 0.0
    %86 = vmatpush1.msra.mxu0 %v31
    %87 = vmatprep.subr.mxu0 0.0
    %88 = vmatpush1.msra.mxu0 %v30
    %89 = vmatprep.subr.mxu0 0.0
    %90 = vmatpush1.msra.mxu0 %v29
    %91 = vmatprep.subr.mxu0 0.0
    %92 = vmatpush1.msra.mxu0 %v28
    %93 = vmatprep.subr.mxu0 0.0
    %94 = vmatpush2.msra.mxu0 0.0
    %95 = vmatprep.subr.mxu0 0.0
    %96 = vmatpush2.msra.mxu0 0.0
    %97 = vmatprep.subr.mxu0 0.0
    %98 = vmatpush2.msra.mxu0 0.0
    %99 = vmatprep.subr.mxu0 0.0
    %100 = vmatpush2.msra.mxu0 0.0
    %101 = vmatprep.subr.mxu0 0.0
    %102 = vmatpush2.msra.mxu0 0.0
    %103 = vmatprep.subr.mxu0 0.0
    %104 = vmatpush2.msra.mxu0 0.0
    %105 = vmatprep.subr.mxu0 0.0
    %106 = vmatpush2.msra.mxu0 0.0
    %107 = vmatprep.subr.mxu0 0.0
    %108 = vmatpush2.msra.mxu0 0.0
    %109 = vmatprep.subr.mxu0 0.0
    %110 = vmatpush2.msra.mxu0 0.0
    %111 = vmatprep.subr.mxu0 0.0
    %112 = vmatpush2.msra.mxu0 0.0
    %113 = vmatprep.subr.mxu0 0.0
    %114 = vmatpush2.msra.mxu0 0.0
    %115 = vmatprep.subr.mxu0 0.0
    %116 = vmatpush2.msra.mxu0 0.0
    %117 = vmatprep.subr.mxu0 0.0
    %118 = vmatpush2.msra.mxu0 0.0
    %119 = vmatprep.subr.mxu0 0.0
    %120 = vmatpush2.msra.mxu0 0.0
    %121 = vmatprep.subr.mxu0 0.0
    %122 = vmatpush2.msra.mxu0 0.0
    %123 = vmatprep.subr.mxu0 0.0
    %124 = vmatpush2.msra.mxu0 0.0
    %125 = vmatprep.mubr.f32.mxu0 0.0
    %126 = vmatmul.mubr.f32.gmra.mxu0 %v56
    %v127 = vpop.f32.mrf.mxu0
    %v128 = vadd.f32 0.0, %v127
    %v129 = vpop.f32.mrf.mxu0
    %130 = vmatprep.mubr.f32.mxu0 0.0
    %131 = vmatmul.mubr.f32.gmra.mxu0 %v59
    %v132 = vpop.f32.mrf.mxu0
    %v133 = vadd.f32 0.0, %v132
    %v134 = vpop.f32.mrf.mxu0
    %135 = vdwg.mxu0
    %v136 = vlaneseq
    %v137 = vshrl.u32 %v136, 7
    %v138 = vsub.s32 0, %v137
    %v139 = vrot.slane %v32, %v138
    %141 = vrot.lane.b32.xlu0 %v139, 32
    %v142 = vpop.permute.xlu0 %141
    %v144 = vadd.f32 %v128, %v142
    %v145 = vadd.f32 %v133, %v142
    %v146 = vlaneseq
    %v147 = vshrl.u32 %v146, 7
    %v148 = vsub.s32 1, %v147
    %v149 = vrot.slane %v33, %v148
    %v150 = vadd.f32 %v128, %v149
    %v151 = vadd.f32 %v133, %v149
    %v153 = vsel %vm54, %v46, 0
    %v156 = vsel %vm54, %v47, 0
    %v159 = vsel %vm54, %v48, 0
    %v162 = vsel %vm54, %v49, 0
    %v165 = vsel %vm54, %v50, 0
    %v168 = vsel %vm54, %v51, 0
    %v171 = vsel %vm54, %v52, 0
    %v174 = vsel %vm54, %v53, 0
    %176 = vmatprep.subr.mxu0 0.0
    %177 = vmatpush1.msra.mxu0 0.0
    %178 = vmatprep.subr.mxu0 0.0
    %179 = vmatpush1.msra.mxu0 0.0
    %180 = vmatprep.subr.mxu0 0.0
    %181 = vmatpush1.msra.mxu0 0.0
    %182 = vmatprep.subr.mxu0 0.0
    %183 = vmatpush1.msra.mxu0 0.0
    %184 = vmatprep.subr.mxu0 0.0
    %185 = vmatpush1.msra.mxu0 0.0
    %186 = vmatprep.subr.mxu0 0.0
    %187 = vmatpush1.msra.mxu0 0.0
    %188 = vmatprep.subr.mxu0 0.0
    %189 = vmatpush1.msra.mxu0 0.0
    %190 = vmatprep.subr.mxu0 0.0
    %191 = vmatpush1.msra.mxu0 0.0
    %192 = vmatprep.subr.mxu0 0.0
    %193 = vmatpush1.msra.mxu0 0.0
    %194 = vmatprep.subr.mxu0 0.0
    %195 = vmatpush1.msra.mxu0 0.0
    %196 = vmatprep.subr.mxu0 0.0
    %197 = vmatpush1.msra.mxu0 0.0
    %198 = vmatprep.subr.mxu0 0.0
    %199 = vmatpush1.msra.mxu0 0.0
    %200 = vmatprep.subr.mxu0 0.0
    %201 = vmatpush1.msra.mxu0 %v35
    %202 = vmatprep.subr.mxu0 0.0
    %203 = vmatpush1.msra.mxu0 %v34
    %204 = vmatprep.subr.mxu0 0.0
    %205 = vmatpush1.msra.mxu0 %v33
    %206 = vmatprep.subr.mxu0 0.0
    %207 = vmatpush1.msra.mxu0 %v32
    %208 = vmatprep.subr.mxu0 0.0
    %209 = vmatpush2.msra.mxu0 0.0
    %210 = vmatprep.subr.mxu0 0.0
    %211 = vmatpush2.msra.mxu0 0.0
    %212 = vmatprep.subr.mxu0 0.0
    %213 = vmatpush2.msra.mxu0 0.0
    %214 = vmatprep.subr.mxu0 0.0
    %215 = vmatpush2.msra.mxu0 0.0
    %216 = vmatprep.subr.mxu0 0.0
    %217 = vmatpush2.msra.mxu0 0.0
    %218 = vmatprep.subr.mxu0 0.0
    %219 = vmatpush2.msra.mxu0 0.0
    %220 = vmatprep.subr.mxu0 0.0
    %221 = vmatpush2.msra.mxu0 0.0
    %222 = vmatprep.subr.mxu0 0.0
    %223 = vmatpush2.msra.mxu0 0.0
    %224 = vmatprep.subr.mxu0 0.0
    %225 = vmatpush2.msra.mxu0 0.0
    %226 = vmatprep.subr.mxu0 0.0
    %227 = vmatpush2.msra.mxu0 0.0
    %228 = vmatprep.subr.mxu0 0.0
    %229 = vmatpush2.msra.mxu0 0.0
    %230 = vmatprep.subr.mxu0 0.0
    %231 = vmatpush2.msra.mxu0 0.0
    %232 = vmatprep.subr.mxu0 0.0
    %233 = vmatpush2.msra.mxu0 0.0
    %234 = vmatprep.subr.mxu0 0.0
    %235 = vmatpush2.msra.mxu0 0.0
    %236 = vmatprep.subr.mxu0 0.0
    %237 = vmatpush2.msra.mxu0 0.0
    %238 = vmatprep.subr.mxu0 0.0
    %239 = vmatpush2.msra.mxu0 0.0
    %240 = vmatprep.mubr.f32.mxu0 0.0
    %241 = vmatmul.mubr.f32.gmra.mxu0 %v153
    %v242 = vpop.f32.mrf.mxu0
    %v243 = vadd.f32 0.0, %v242
    %v244 = vpop.f32.mrf.mxu0
    %245 = vmatprep.mubr.f32.mxu0 0.0
    %246 = vmatmul.mubr.f32.gmra.mxu0 %v156
    %v247 = vpop.f32.mrf.mxu0
    %v248 = vadd.f32 0.0, %v247
    %v249 = vpop.f32.mrf.mxu0
    %250 = vmatprep.mubr.f32.mxu0 0.0
    %251 = vmatmul.mubr.f32.gmra.mxu0 %v159
    %v252 = vpop.f32.mrf.mxu0
    %v253 = vadd.f32 0.0, %v252
    %v254 = vpop.f32.mrf.mxu0
    %255 = vmatprep.mubr.f32.mxu0 0.0
    %256 = vmatmul.mubr.f32.gmra.mxu0 %v162
    %v257 = vpop.f32.mrf.mxu0
    %v258 = vadd.f32 0.0, %v257
    %v259 = vpop.f32.mrf.mxu0
    %260 = vmatprep.mubr.f32.mxu0 0.0
    %261 = vmatmul.mubr.f32.gmra.mxu0 %v165
    %v262 = vpop.f32.mrf.mxu0
    %v263 = vadd.f32 0.0, %v262
    %v264 = vpop.f32.mrf.mxu0
    %265 = vmatprep.mubr.f32.mxu0 0.0
    %266 = vmatmul.mubr.f32.gmra.mxu0 %v168
    %v267 = vpop.f32.mrf.mxu0
    %v268 = vadd.f32 0.0, %v267
    %v269 = vpop.f32.mrf.mxu0
    %270 = vmatprep.mubr.f32.mxu0 0.0
    %271 = vmatmul.mubr.f32.gmra.mxu0 %v171
    %v272 = vpop.f32.mrf.mxu0
    %v273 = vadd.f32 0.0, %v272
    %v274 = vpop.f32.mrf.mxu0
    %275 = vmatprep.mubr.f32.mxu0 0.0
    %276 = vmatmul.mubr.f32.gmra.mxu0 %v174
    %v277 = vpop.f32.mrf.mxu0
    %v278 = vadd.f32 0.0, %v277
    %v279 = vpop.f32.mrf.mxu0
    %280 = vdwg.mxu0
    %v281 = vlaneseq
    %v282 = vshrl.u32 %v281, 7
    %v283 = vsub.s32 1, %v282
    %v284 = vrot.slane %v32, %v283
    %286 = vrot.lane.b32.xlu0 %v284, 32
    %v287 = vpop.permute.xlu0 %286
    %v289 = vadd.f32 %v243, %v287
    %v290 = vadd.f32 %v248, %v287
    %v291 = vadd.f32 %v253, %v287
    %v292 = vadd.f32 %v258, %v287
    %v293 = vadd.f32 %v263, %v287
    %v294 = vadd.f32 %v268, %v287
    %v295 = vadd.f32 %v273, %v287
    %v296 = vadd.f32 %v278, %v287
    %v297 = vlaneseq
    %v298 = vshrl.u32 %v297, 7
    %v299 = vsub.s32 2, %v298
    %v300 = vrot.slane %v32, %v299
    %302 = vrot.lane.b32.xlu0 %v300, 64
    %v303 = vpop.permute.xlu0 %302
    %v305 = vadd.f32 %v243, %v303
    %v306 = vadd.f32 %v248, %v303
    %v307 = vadd.f32 %v253, %v303
    %v308 = vadd.f32 %v258, %v303
    %v309 = vadd.f32 %v263, %v303
    %v310 = vadd.f32 %v268, %v303
    %v311 = vadd.f32 %v273, %v303
    %v312 = vadd.f32 %v278, %v303
    %vm313 = vcmask 785920
    %v314 = vsel %vm313, %v128, 0.0
    %v315 = vrot.slane %v314, 4
    %v316 = vadd.f32 %v314, %v315
    %v317 = vrot.slane %v316, 2
    %v318 = vadd.f32 %v316, %v317
    %v319 = vrot.slane %v318, 1
    %v320 = vadd.f32 %v318, %v319
    %v321 = vsel %vm313, %v133, 0.0
    %v322 = vrot.slane %v321, 4
    %v323 = vadd.f32 %v321, %v322
    %v324 = vrot.slane %v323, 2
    %v325 = vadd.f32 %v323, %v324
    %v326 = vrot.slane %v325, 1
    %v327 = vadd.f32 %v325, %v326
    %vm328 = vcmask 1040384
    %v329 = vsel %vm328, %v320, %v327
    %v330 = vmul.f32 %v329, 0.125
    %v331 = vlaneseq
    %v332 = vshrl.u32 %v331, 7
    %v333 = vsub.s32 7, %v332
    %v334 = vrot.slane %v32, %v333
    %336 = vrot.lane.b32.xlu0 %v334, 96
    %v337 = vpop.permute.xlu0 %336
    %v339 = vadd.f32 %v330, %v337
    %vm340 = vcmask 779776
    %v341 = vsel %vm340, %v339, -inf
    %342 = vmax.xlane.f32.xlu0 %v341
    %v343 = vpop.xlane.xlu0 %342
    %v344 = vsub.f32 %v339, %v343
    %v345 = vmul.f32 %v344, 1.442695
    %v346 = vpow.pop %v345
    %348 = vrot.lane.b32.xlu0 %v346, 64
    %v349 = vpop.permute.xlu0 %348
    %vm351 = vcmask 254976
    %v352 = vsel %vm351, %v349, 0.0
    %353 = vadd.xlane.f32.xlu0 %v352
    %v354 = vpop.xlane.xlu0 %353
    %v355 = vrcp.pop %v354
    %v356 = vmul.f32 %v346, %v355
    %v357 = vmul.f32 %v144, %v36
    %v358 = vmul.f32 %v145, %v37
    %v359 = vmul.f32 %v144, %v38
    %v360 = vmul.f32 %v145, %v39
    %v361 = vmul.f32 %v144, %v40
    %v362 = vmul.f32 %v145, %v41
    %v363 = vmul.f32 %v144, %v42
    %v364 = vmul.f32 %v145, %v43
    %v366 = vsel %vm54, %v357, 0
    %v369 = vsel %vm54, %v358, 0
    %v372 = vsel %vm54, %v359, 0
    %v375 = vsel %vm54, %v360, 0
    %v378 = vsel %vm54, %v361, 0
    %v381 = vsel %vm54, %v362, 0
    %v384 = vsel %vm54, %v363, 0
    %v387 = vsel %vm54, %v364, 0
    %v390 = vsel %vm54, %v289, 0
    %v393 = vsel %vm54, %v290, 0
    %v396 = vsel %vm54, %v291, 0
    %v399 = vsel %vm54, %v292, 0
    %v402 = vsel %vm54, %v293, 0
    %v405 = vsel %vm54, %v294, 0
    %v408 = vsel %vm54, %v295, 0
    %v411 = vsel %vm54, %v296, 0
    %413 = vmatprep.subr.mxu0 0.0
    %414 = vmatpush1.xpose.msra.mxu0 0.0
    %415 = vmatprep.subr.mxu0 0.0
    %416 = vmatpush1.xpose.msra.mxu0 0.0
    %417 = vmatprep.subr.mxu0 0.0
    %418 = vmatpush1.xpose.msra.mxu0 0.0
    %419 = vmatprep.subr.mxu0 0.0
    %420 = vmatpush1.xpose.msra.mxu0 0.0
    %421 = vmatprep.subr.mxu0 0.0
    %422 = vmatpush1.xpose.msra.mxu0 0.0
    %423 = vmatprep.subr.mxu0 0.0
    %424 = vmatpush1.xpose.msra.mxu0 0.0
    %425 = vmatprep.subr.mxu0 0.0
    %426 = vmatpush1.xpose.msra.mxu0 0.0
    %427 = vmatprep.subr.mxu0 0.0
    %428 = vmatpush1.xpose.msra.mxu0 0.0
    %429 = vmatprep.subr.mxu0 0.0
    %430 = vmatpush1.xpose.msra.mxu0 %v411
    %431 = vmatprep.subr.mxu0 0.0
    %432 = vmatpush1.xpose.msra.mxu0 %v408
    %433 = vmatprep.subr.mxu0 0.0
    %434 = vmatpush1.xpose.msra.mxu0 %v405
    %435 = vmatprep.subr.mxu0 0.0
    %436 = vmatpush1.xpose.msra.mxu0 %v402
    %437 = vmatprep.subr.mxu0 0.0
    %438 = vmatpush1.xpose.msra.mxu0 %v399
    %439 = vmatprep.subr.mxu0 0.0
    %440 = vmatpush1.xpose.msra.mxu0 %v396
    %441 = vmatprep.subr.mxu0 0.0
    %442 = vmatpush1.xpose.msra.mxu0 %v393
    %443 = vmatprep.subr.mxu0 0.0
    %444 = vmatpush1.xpose.msra.mxu0 %v390
    %445 = vmatprep.subr.mxu0 0.0
    %446 = vmatpush2.xpose.msra.mxu0 0.0
    %447 = vmatprep.subr.mxu0 0.0
    %448 = vmatpush2.xpose.msra.mxu0 0.0
    %449 = vmatprep.subr.mxu0 0.0
    %450 = vmatpush2.xpose.msra.mxu0 0.0
    %451 = vmatprep.subr.mxu0 0.0
    %452 = vmatpush2.xpose.msra.mxu0 0.0
    %453 = vmatprep.subr.mxu0 0.0
    %454 = vmatpush2.xpose.msra.mxu0 0.0
    %455 = vmatprep.subr.mxu0 0.0
    %456 = vmatpush2.xpose.msra.mxu0 0.0
    %457 = vmatprep.subr.mxu0 0.0
    %458 = vmatpush2.xpose.msra.mxu0 0.0
    %459 = vmatprep.subr.mxu0 0.0
    %460 = vmatpush2.xpose.msra.mxu0 0.0
    %461 = vmatprep.subr.mxu0 0.0
    %462 = vmatpush2.xpose.msra.mxu0 0.0
    %463 = vmatprep.subr.mxu0 0.0
    %464 = vmatpush2.xpose.msra.mxu0 0.0
    %465 = vmatprep.subr.mxu0 0.0
    %466 = vmatpush2.xpose.msra.mxu0 0.0
    %467 = vmatprep.subr.mxu0 0.0
    %468 = vmatpush2.xpose.msra.mxu0 0.0
    %469 = vmatprep.subr.mxu0 0.0
    %470 = vmatpush2.xpose.msra.mxu0 0.0
    %471 = vmatprep.subr.mxu0 0.0
    %472 = vmatpush2.xpose.msra.mxu0 0.0
    %473 = vmatprep.subr.mxu0 0.0
    %474 = vmatpush2.xpose.msra.mxu0 0.0
    %475 = vmatprep.subr.mxu0 0.0
    %476 = vmatpush2.xpose.msra.mxu0 0.0
    %477 = vmatprep.mubr.f32.mxu0 0.0
    %478 = vmatmul.mubr.f32.gmra.mxu0 %v366
    %v479 = vpop.f32.mrf.mxu0
    %v480 = vadd.f32 0.0, %v479
    %v481 = vpop.f32.mrf.mxu0
    %482 = vmatprep.mubr.f32.mxu0 0.0
    %483 = vmatmul.mubr.f32.gmra.mxu0 %v369
    %v484 = vpop.f32.mrf.mxu0
    %v485 = vadd.f32 0.0, %v484
    %v486 = vpop.f32.mrf.mxu0
    %487 = vmatprep.mubr.f32.mxu0 0.0
    %488 = vmatmul.mubr.f32.gmra.mxu0 %v372
    %v489 = vpop.f32.mrf.mxu0
    %v490 = vadd.f32 0.0, %v489
    %v491 = vpop.f32.mrf.mxu0
    %492 = vmatprep.mubr.f32.mxu0 0.0
    %493 = vmatmul.mubr.f32.gmra.mxu0 %v375
    %v494 = vpop.f32.mrf.mxu0
    %v495 = vadd.f32 0.0, %v494
    %v496 = vpop.f32.mrf.mxu0
    %497 = vmatprep.mubr.f32.mxu0 0.0
    %498 = vmatmul.mubr.f32.gmra.mxu0 %v378
    %v499 = vpop.f32.mrf.mxu0
    %v500 = vadd.f32 0.0, %v499
    %v501 = vpop.f32.mrf.mxu0
    %502 = vmatprep.mubr.f32.mxu0 0.0
    %503 = vmatmul.mubr.f32.gmra.mxu0 %v381
    %v504 = vpop.f32.mrf.mxu0
    %v505 = vadd.f32 0.0, %v504
    %v506 = vpop.f32.mrf.mxu0
    %507 = vmatprep.mubr.f32.mxu0 0.0
    %508 = vmatmul.mubr.f32.gmra.mxu0 %v384
    %v509 = vpop.f32.mrf.mxu0
    %v510 = vadd.f32 0.0, %v509
    %v511 = vpop.f32.mrf.mxu0
    %512 = vmatprep.mubr.f32.mxu0 0.0
    %513 = vmatmul.mubr.f32.gmra.mxu0 %v387
    %v514 = vpop.f32.mrf.mxu0
    %v515 = vadd.f32 0.0, %v514
    %v516 = vpop.f32.mrf.mxu0
    %517 = vdwg.mxu0
    %v518 = vmul.f32 %v480, 0.35355338
    %v519 = vmul.f32 %v485, 0.35355338
    %v520 = vmul.f32 %v490, 0.35355338
    %v521 = vmul.f32 %v495, 0.35355338
    %v522 = vmul.f32 %v500, 0.35355338
    %v523 = vmul.f32 %v505, 0.35355338
    %v524 = vmul.f32 %v510, 0.35355338
    %v525 = vmul.f32 %v515, 0.35355338
    %534 = vrot.lane.b32.xlu0 %v36, 96
    %v535 = vpop.permute.xlu0 %534
    %536 = vrot.lane.b32.xlu0 %v37, 96
    %v537 = vpop.permute.xlu0 %536
    %538 = vrot.lane.b32.xlu0 %v38, 96
    %v539 = vpop.permute.xlu0 %538
    %540 = vrot.lane.b32.xlu0 %v39, 96
    %v541 = vpop.permute.xlu0 %540
    %542 = vrot.lane.b32.xlu0 %v40, 96
    %v543 = vpop.permute.xlu0 %542
    %544 = vrot.lane.b32.xlu0 %v41, 96
    %v545 = vpop.permute.xlu0 %544
    %546 = vrot.lane.b32.xlu0 %v42, 96
    %v547 = vpop.permute.xlu0 %546
    %548 = vrot.lane.b32.xlu0 %v43, 96
    %v549 = vpop.permute.xlu0 %548
    %v558 = vadd.f32 %v518, %v535
    %v559 = vadd.f32 %v519, %v537
    %v560 = vadd.f32 %v520, %v539
    %v561 = vadd.f32 %v521, %v541
    %v562 = vadd.f32 %v522, %v543
    %v563 = vadd.f32 %v523, %v545
    %v564 = vadd.f32 %v524, %v547
    %v565 = vadd.f32 %v525, %v549
    %vm566 = vcmask 523264
    %v567 = vsel %vm566, %v558, -inf
    %568 = vmax.xlane.f32.xlu0 %v567
    %v569 = vpop.xlane.xlu0 %568
    %v570 = vsel %vm566, %v559, -inf
    %571 = vmax.xlane.f32.xlu0 %v570
    %v572 = vpop.xlane.xlu0 %571
    %v573 = vsel %vm566, %v560, -inf
    %574 = vmax.xlane.f32.xlu0 %v573
    %v575 = vpop.xlane.xlu0 %574
    %v576 = vsel %vm566, %v561, -inf
    %577 = vmax.xlane.f32.xlu0 %v576
    %v578 = vpop.xlane.xlu0 %577
    %v579 = vsel %vm566, %v562, -inf
    %580 = vmax.xlane.f32.xlu0 %v579
    %v581 = vpop.xlane.xlu0 %580
    %v582 = vsel %vm566, %v563, -inf
    %583 = vmax.xlane.f32.xlu0 %v582
    %v584 = vpop.xlane.xlu0 %583
    %v585 = vsel %vm566, %v564, -inf
    %586 = vmax.xlane.f32.xlu0 %v585
    %v587 = vpop.xlane.xlu0 %586
    %v588 = vsel %vm566, %v565, -inf
    %589 = vmax.xlane.f32.xlu0 %v588
    %v590 = vpop.xlane.xlu0 %589
    %v591 = vsub.f32 %v558, %v569
    %v592 = vsub.f32 %v559, %v572
    %v593 = vsub.f32 %v560, %v575
    %v594 = vsub.f32 %v561, %v578
    %v595 = vsub.f32 %v562, %v581
    %v596 = vsub.f32 %v563, %v584
    %v597 = vsub.f32 %v564, %v587
    %v598 = vsub.f32 %v565, %v590
    %v599 = vmul.f32 %v591, 1.442695
    %v600 = vpow.pop %v599
    %v601 = vmul.f32 %v592, 1.442695
    %v602 = vpow.pop %v601
    %v603 = vmul.f32 %v593, 1.442695
    %v604 = vpow.pop %v603
    %v605 = vmul.f32 %v594, 1.442695
    %v606 = vpow.pop %v605
    %v607 = vmul.f32 %v595, 1.442695
    %v608 = vpow.pop %v607
    %v609 = vmul.f32 %v596, 1.442695
    %v610 = vpow.pop %v609
    %v611 = vmul.f32 %v597, 1.442695
    %v612 = vpow.pop %v611
    %v613 = vmul.f32 %v598, 1.442695
    %v614 = vpow.pop %v613
    %v615 = vsel %vm566, %v600, 0.0
    %616 = vadd.xlane.f32.xlu0 %v615
    %v617 = vpop.xlane.xlu0 %616
    %v618 = vsel %vm566, %v602, 0.0
    %619 = vadd.xlane.f32.xlu0 %v618
    %v620 = vpop.xlane.xlu0 %619
    %v621 = vsel %vm566, %v604, 0.0
    %622 = vadd.xlane.f32.xlu0 %v621
    %v623 = vpop.xlane.xlu0 %622
    %v624 = vsel %vm566, %v606, 0.0
    %625 = vadd.xlane.f32.xlu0 %v624
    %v626 = vpop.xlane.xlu0 %625
    %v627 = vsel %vm566, %v608, 0.0
    %628 = vadd.xlane.f32.xlu0 %v627
    %v629 = vpop.xlane.xlu0 %628
    %v630 = vsel %vm566, %v610, 0.0
    %631 = vadd.xlane.f32.xlu0 %v630
    %v632 = vpop.xlane.xlu0 %631
    %v633 = vsel %vm566, %v612, 0.0
    %634 = vadd.xlane.f32.xlu0 %v633
    %v635 = vpop.xlane.xlu0 %634
    %v636 = vsel %vm566, %v614, 0.0
    %637 = vadd.xlane.f32.xlu0 %v636
    %v638 = vpop.xlane.xlu0 %637
    %v639 = vrcp.pop %v617
    %v640 = vrcp.pop %v620
    %v641 = vrcp.pop %v623
    %v642 = vrcp.pop %v626
    %v643 = vrcp.pop %v629
    %v644 = vrcp.pop %v632
    %v645 = vrcp.pop %v635
    %v646 = vrcp.pop %v638
    %v647 = vmul.f32 %v600, %v639
    %v648 = vmul.f32 %v602, %v640
    %v649 = vmul.f32 %v604, %v641
    %v650 = vmul.f32 %v606, %v642
    %v651 = vmul.f32 %v608, %v643
    %v652 = vmul.f32 %v610, %v644
    %v653 = vmul.f32 %v612, %v645
    %v654 = vmul.f32 %v614, %v646
    %663 = vrot.lane.b32.xlu0 %v305, 96
    %v664 = vpop.permute.xlu0 %663
    %665 = vrot.lane.b32.xlu0 %v306, 96
    %v666 = vpop.permute.xlu0 %665
    %667 = vrot.lane.b32.xlu0 %v307, 96
    %v668 = vpop.permute.xlu0 %667
    %669 = vrot.lane.b32.xlu0 %v308, 96
    %v670 = vpop.permute.xlu0 %669
    %671 = vrot.lane.b32.xlu0 %v309, 96
    %v672 = vpop.permute.xlu0 %671
    %673 = vrot.lane.b32.xlu0 %v310, 96
    %v674 = vpop.permute.xlu0 %673
    %675 = vrot.lane.b32.xlu0 %v311, 96
    %v676 = vpop.permute.xlu0 %675
    %677 = vrot.lane.b32.xlu0 %v312, 96
    %v678 = vpop.permute.xlu0 %677
    %v688 = vsel %vm566, %v647, 0
    %v691 = vsel %vm566, %v648, 0
    %v694 = vsel %vm566, %v649, 0
    %v697 = vsel %vm566, %v650, 0
    %v700 = vsel %vm566, %v651, 0
    %v703 = vsel %vm566, %v652, 0
    %v706 = vsel %vm566, %v653, 0
    %v709 = vsel %vm566, %v654, 0
    %711 = vmatprep.subr.mxu0 0.0
    %712 = vmatpush1.msra.mxu0 0.0
    %713 = vmatprep.subr.mxu0 0.0
    %714 = vmatpush1.msra.mxu0 0.0
    %715 = vmatprep.subr.mxu0 0.0
    %716 = vmatpush1.msra.mxu0 0.0
    %717 = vmatprep.subr.mxu0 0.0
    %718 = vmatpush1.msra.mxu0 0.0
    %719 = vmatprep.subr.mxu0 0.0
    %720 = vmatpush1.msra.mxu0 0.0
    %721 = vmatprep.subr.mxu0 0.0
    %722 = vmatpush1.msra.mxu0 0.0
    %723 = vmatprep.subr.mxu0 0.0
    %724 = vmatpush1.msra.mxu0 0.0
    %725 = vmatprep.subr.mxu0 0.0
    %726 = vmatpush1.msra.mxu0 0.0
    %727 = vmatprep.subr.mxu0 0.0
    %728 = vmatpush1.msra.mxu0 %v678
    %729 = vmatprep.subr.mxu0 0.0
    %730 = vmatpush1.msra.mxu0 %v676
    %731 = vmatprep.subr.mxu0 0.0
    %732 = vmatpush1.msra.mxu0 %v674
    %733 = vmatprep.subr.mxu0 0.0
    %734 = vmatpush1.msra.mxu0 %v672
    %735 = vmatprep.subr.mxu0 0.0
    %736 = vmatpush1.msra.mxu0 %v670
    %737 = vmatprep.subr.mxu0 0.0
    %738 = vmatpush1.msra.mxu0 %v668
    %739 = vmatprep.subr.mxu0 0.0
    %740 = vmatpush1.msra.mxu0 %v666
    %741 = vmatprep.subr.mxu0 0.0
    %742 = vmatpush1.msra.mxu0 %v664
    %743 = vmatprep.subr.mxu0 0.0
    %744 = vmatpush2.msra.mxu0 0.0
    %745 = vmatprep.subr.mxu0 0.0
    %746 = vmatpush2.msra.mxu0 0.0
    %747 = vmatprep.subr.mxu0 0.0
    %748 = vmatpush2.msra.mxu0 0.0
    %749 = vmatprep.subr.mxu0 0.0
    %750 = vmatpush2.msra.mxu0 0.0
    %751 = vmatprep.subr.mxu0 0.0
    %752 = vmatpush2.msra.mxu0 0.0
    %753 = vmatprep.subr.mxu0 0.0
    %754 = vmatpush2.msra.mxu0 0.0
    %755 = vmatprep.subr.mxu0 0.0
    %756 = vmatpush2.msra.mxu0 0.0
    %757 = vmatprep.subr.mxu0 0.0
    %758 = vmatpush2.msra.mxu0 0.0
    %759 = vmatprep.subr.mxu0 0.0
    %760 = vmatpush2.msra.mxu0 0.0
    %761 = vmatprep.subr.mxu0 0.0
    %762 = vmatpush2.msra.mxu0 0.0
    %763 = vmatprep.subr.mxu0 0.0
    %764 = vmatpush2.msra.mxu0 0.0
    %765 = vmatprep.subr.mxu0 0.0
    %766 = vmatpush2.msra.mxu0 0.0
    %767 = vmatprep.subr.mxu0 0.0
    %768 = vmatpush2.msra.mxu0 0.0
    %769 = vmatprep.subr.mxu0 0.0
    %770 = vmatpush2.msra.mxu0 0.0
    %771 = vmatprep.subr.mxu0 0.0
    %772 = vmatpush2.msra.mxu0 0.0
    %773 = vmatprep.subr.mxu0 0.0
    %774 = vmatpush2.msra.mxu0 0.0
    %775 = vmatprep.mubr.f32.mxu0 0.0
    %776 = vmatmul.mubr.f32.gmra.mxu0 %v688
    %v777 = vpop.f32.mrf.mxu0
    %v778 = vadd.f32 0.0, %v777
    %v779 = vpop.f32.mrf.mxu0
    %780 = vmatprep.mubr.f32.mxu0 0.0
    %781 = vmatmul.mubr.f32.gmra.mxu0 %v691
    %v782 = vpop.f32.mrf.mxu0
    %v783 = vadd.f32 0.0, %v782
    %v784 = vpop.f32.mrf.mxu0
    %785 = vmatprep.mubr.f32.mxu0 0.0
    %786 = vmatmul.mubr.f32.gmra.mxu0 %v694
    %v787 = vpop.f32.mrf.mxu0
    %v788 = vadd.f32 0.0, %v787
    %v789 = vpop.f32.mrf.mxu0
    %790 = vmatprep.mubr.f32.mxu0 0.0
    %791 = vmatmul.mubr.f32.gmra.mxu0 %v697
    %v792 = vpop.f32.mrf.mxu0
    %v793 = vadd.f32 0.0, %v792
    %v794 = vpop.f32.mrf.mxu0
    %795 = vmatprep.mubr.f32.mxu0 0.0
    %796 = vmatmul.mubr.f32.gmra.mxu0 %v700
    %v797 = vpop.f32.mrf.mxu0
    %v798 = vadd.f32 0.0, %v797
    %v799 = vpop.f32.mrf.mxu0
    %800 = vmatprep.mubr.f32.mxu0 0.0
    %801 = vmatmul.mubr.f32.gmra.mxu0 %v703
    %v802 = vpop.f32.mrf.mxu0
    %v803 = vadd.f32 0.0, %v802
    %v804 = vpop.f32.mrf.mxu0
    %805 = vmatprep.mubr.f32.mxu0 0.0
    %806 = vmatmul.mubr.f32.gmra.mxu0 %v706
    %v807 = vpop.f32.mrf.mxu0
    %v808 = vadd.f32 0.0, %v807
    %v809 = vpop.f32.mrf.mxu0
    %810 = vmatprep.mubr.f32.mxu0 0.0
    %811 = vmatmul.mubr.f32.gmra.mxu0 %v709
    %v812 = vpop.f32.mrf.mxu0
    %v813 = vadd.f32 0.0, %v812
    %v814 = vpop.f32.mrf.mxu0
    %815 = vdwg.mxu0
    %v816 = vlaneseq
    %v817 = vshrl.u32 %v816, 7
    %v818 = vsub.s32 0, %v817
    %v819 = vrot.slane %v36, %v818
    %v820 = vmul.f32 %v778, %v819
    %v821 = vmul.f32 %v783, %v819
    %v822 = vlaneseq
    %v823 = vshrl.u32 %v822, 7
    %v824 = vsub.s32 0, %v823
    %v825 = vrot.slane %v38, %v824
    %v826 = vmul.f32 %v788, %v825
    %v827 = vmul.f32 %v793, %v825
    %v828 = vadd.f32 %v820, %v826
    %v829 = vadd.f32 %v821, %v827
    %v830 = vadd.f32 %v647, %v649
    %v831 = vadd.f32 %v648, %v650
    %v832 = vlaneseq
    %v833 = vshrl.u32 %v832, 7
    %v834 = vsub.s32 0, %v833
    %v835 = vrot.slane %v40, %v834
    %v836 = vmul.f32 %v798, %v835
    %v837 = vmul.f32 %v803, %v835
    %v838 = vadd.f32 %v828, %v836
    %v839 = vadd.f32 %v829, %v837
    %v840 = vadd.f32 %v830, %v651
    %v841 = vadd.f32 %v831, %v652
    %v842 = vlaneseq
    %v843 = vshrl.u32 %v842, 7
    %v844 = vsub.s32 0, %v843
    %v845 = vrot.slane %v42, %v844
    %v846 = vmul.f32 %v808, %v845
    %v847 = vmul.f32 %v813, %v845
    %v848 = vadd.f32 %v838, %v846
    %v849 = vadd.f32 %v839, %v847
    %v850 = vadd.f32 %v840, %v653
    %v851 = vadd.f32 %v841, %v654
    %v852 = vmul.f32 %v850, 0.25
    %v853 = vmul.f32 %v851, 0.25
    %858 = vrot.lane.b32.xlu0 %v32, 64
    %v859 = vpop.permute.xlu0 %858
    %860 = vrot.lane.b32.xlu0 %v33, 64
    %v861 = vpop.permute.xlu0 %860
    %862 = vrot.lane.b32.xlu0 %v34, 64
    %v863 = vpop.permute.xlu0 %862
    %864 = vrot.lane.b32.xlu0 %v35, 64
    %v865 = vpop.permute.xlu0 %864
    %v871 = vsel %vm54, %v848, 0
    %v874 = vsel %vm54, %v849, 0
    %876 = vmatprep.subr.mxu0 0.0
    %877 = vmatpush1.msra.mxu0 0.0
    %878 = vmatprep.subr.mxu0 0.0
    %879 = vmatpush1.msra.mxu0 0.0
    %880 = vmatprep.subr.mxu0 0.0
    %881 = vmatpush1.msra.mxu0 0.0
    %882 = vmatprep.subr.mxu0 0.0
    %883 = vmatpush1.msra.mxu0 0.0
    %884 = vmatprep.subr.mxu0 0.0
    %885 = vmatpush1.msra.mxu0 0.0
    %886 = vmatprep.subr.mxu0 0.0
    %887 = vmatpush1.msra.mxu0 0.0
    %888 = vmatprep.subr.mxu0 0.0
    %889 = vmatpush1.msra.mxu0 0.0
    %890 = vmatprep.subr.mxu0 0.0
    %891 = vmatpush1.msra.mxu0 0.0
    %892 = vmatprep.subr.mxu0 0.0
    %893 = vmatpush1.msra.mxu0 0.0
    %894 = vmatprep.subr.mxu0 0.0
    %895 = vmatpush1.msra.mxu0 0.0
    %896 = vmatprep.subr.mxu0 0.0
    %897 = vmatpush1.msra.mxu0 0.0
    %898 = vmatprep.subr.mxu0 0.0
    %899 = vmatpush1.msra.mxu0 0.0
    %900 = vmatprep.subr.mxu0 0.0
    %901 = vmatpush1.msra.mxu0 %v865
    %902 = vmatprep.subr.mxu0 0.0
    %903 = vmatpush1.msra.mxu0 %v863
    %904 = vmatprep.subr.mxu0 0.0
    %905 = vmatpush1.msra.mxu0 %v861
    %906 = vmatprep.subr.mxu0 0.0
    %907 = vmatpush1.msra.mxu0 %v859
    %908 = vmatprep.subr.mxu0 0.0
    %909 = vmatpush2.msra.mxu0 0.0
    %910 = vmatprep.subr.mxu0 0.0
    %911 = vmatpush2.msra.mxu0 0.0
    %912 = vmatprep.subr.mxu0 0.0
    %913 = vmatpush2.msra.mxu0 0.0
    %914 = vmatprep.subr.mxu0 0.0
    %915 = vmatpush2.msra.mxu0 0.0
    %916 = vmatprep.subr.mxu0 0.0
    %917 = vmatpush2.msra.mxu0 0.0
    %918 = vmatprep.subr.mxu0 0.0
    %919 = vmatpush2.msra.mxu0 0.0
    %920 = vmatprep.subr.mxu0 0.0
    %921 = vmatpush2.msra.mxu0 0.0
    %922 = vmatprep.subr.mxu0 0.0
    %923 = vmatpush2.msra.mxu0 0.0
    %924 = vmatprep.subr.mxu0 0.0
    %925 = vmatpush2.msra.mxu0 0.0
    %926 = vmatprep.subr.mxu0 0.0
    %927 = vmatpush2.msra.mxu0 0.0
    %928 = vmatprep.subr.mxu0 0.0
    %929 = vmatpush2.msra.mxu0 0.0
    %930 = vmatprep.subr.mxu0 0.0
    %931 = vmatpush2.msra.mxu0 0.0
    %932 = vmatprep.subr.mxu0 0.0
    %933 = vmatpush2.msra.mxu0 0.0
    %934 = vmatprep.subr.mxu0 0.0
    %935 = vmatpush2.msra.mxu0 0.0
    %936 = vmatprep.subr.mxu0 0.0
    %937 = vmatpush2.msra.mxu0 0.0
    %938 = vmatprep.subr.mxu0 0.0
    %939 = vmatpush2.msra.mxu0 0.0
    %940 = vmatprep.mubr.f32.mxu0 0.0
    %941 = vmatmul.mubr.f32.gmra.mxu0 %v871
    %v942 = vpop.f32.mrf.mxu0
    %v943 = vadd.f32 0.0, %v942
    %v944 = vpop.f32.mrf.mxu0
    %945 = vmatprep.mubr.f32.mxu0 0.0
    %946 = vmatmul.mubr.f32.gmra.mxu0 %v874
    %v947 = vpop.f32.mrf.mxu0
    %v948 = vadd.f32 0.0, %v947
    %v949 = vpop.f32.mrf.mxu0
    %950 = vdwg.mxu0
    %953 = vrot.lane.b32.xlu0 %v943, 32
    %v954 = vpop.permute.xlu0 %953
    %955 = vrot.lane.b32.xlu0 %v948, 32
    %v956 = vpop.permute.xlu0 %955
    %v959 = vadd.f32 %v128, %v954
    %v960 = vadd.f32 %v133, %v956
    %v961 = vlaneseq
    %v962 = vshrl.u32 %v961, 7
    %v963 = vsub.s32 3, %v962
    %v964 = vrot.slane %v32, %v963
    %966 = vrot.lane.b32.xlu0 %v964, 64
    %v967 = vpop.permute.xlu0 %966
    %v969 = vadd.f32 %v959, %v967
    %v970 = vadd.f32 %v960, %v967
    %973 = vrot.lane.b32.xlu0 %v969, 96
    %v974 = vpop.permute.xlu0 %973
    %975 = vrot.lane.b32.xlu0 %v970, 96
    %v976 = vpop.permute.xlu0 %975
    %v979 = vsel %vm54, %v974, 0.0
    %980 = vadd.xlane.f32.xlu0 %v979
    %v981 = vpop.xlane.xlu0 %980
    %v982 = vsel %vm54, %v976, 0.0
    %983 = vadd.xlane.f32.xlu0 %v982
    %v984 = vpop.xlane.xlu0 %983
    %v985 = vrcp.pop 32.0
    %v986 = vmul.f32 %v981, %v985
    %v987 = vmul.f32 %v984, %v985
    %v988 = vsub.f32 %v969, %v986
    %v989 = vsub.f32 %v970, %v987
    %v990 = vmul.f32 %v988, %v988
    %v991 = vmul.f32 %v989, %v989
    %994 = vrot.lane.b32.xlu0 %v990, 96
    %v995 = vpop.permute.xlu0 %994
    %996 = vrot.lane.b32.xlu0 %v991, 96
    %v997 = vpop.permute.xlu0 %996
    %v1000 = vsel %vm54, %v995, 0.0
    %1001 = vadd.xlane.f32.xlu0 %v1000
    %v1002 = vpop.xlane.xlu0 %1001
    %v1003 = vsel %vm54, %v997, 0.0
    %1004 = vadd.xlane.f32.xlu0 %v1003
    %v1005 = vpop.xlane.xlu0 %1004
    %v1006 = vmul.f32 %v1002, %v985
    %v1007 = vmul.f32 %v1005, %v985
    %v1008 = vadd.f32 %v1006, 1e-05
    %v1009 = vadd.f32 %v1007, 1e-05
    %v1010 = vrsqrt.pop %v1008
    %v1011 = vrsqrt.pop %v1009
    %v1012 = vmul.f32 %v988, %v1010
    %v1013 = vmul.f32 %v989, %v1011
    %v1014 = vlaneseq
    %v1015 = vshrl.u32 %v1014, 7
    %v1016 = vsub.s32 4, %v1015
    %v1017 = vrot.slane %v32, %v1016
    %1019 = vrot.lane.b32.xlu0 %v1017, 64
    %v1020 = vpop.permute.xlu0 %1019
    %v1022 = vmul.f32 %v1012, %v1020
    %v1023 = vmul.f32 %v1013, %v1020
    %v1024 = vlaneseq
    %v1025 = vshrl.u32 %v1024, 7
    %v1026 = vsub.s32 5, %v1025
    %v1027 = vrot.slane %v32, %v1026
    %1029 = vrot.lane.b32.xlu0 %v1027, 64
    %v1030 = vpop.permute.xlu0 %1029
    %v1032 = vadd.f32 %v1022, %v1030
    %v1033 = vadd.f32 %v1023, %v1030
    %v1034 = vlaneseq
    %v1035 = vshrl.u32 %v1034, 7
    %v1036 = vsub.s32 6, %v1035
    %v1037 = vrot.slane %v32, %v1036
    %1039 = vrot.lane.b32.xlu0 %v1037, 64
    %v1040 = vpop.permute.xlu0 %1039
    %v1042 = vmul.f32 %v1032, %v1040
    %v1043 = vmul.f32 %v1033, %v1040
    %1046 = vrot.lane.b32.xlu0 %v1042, 96
    %v1047 = vpop.permute.xlu0 %1046
    %1048 = vrot.lane.b32.xlu0 %v1043, 96
    %v1049 = vpop.permute.xlu0 %1048
    %v1052 = vsel %vm54, %v1047, 0.0
    %1053 = vadd.xlane.f32.xlu0 %v1052
    %v1054 = vpop.xlane.xlu0 %1053
    %v1055 = vsel %vm54, %v1049, 0.0
    %1056 = vadd.xlane.f32.xlu0 %v1055
    %v1057 = vpop.xlane.xlu0 %1056
    %v1058 = vadd.f32 %v150, %v1054
    %v1059 = vadd.f32 %v151, %v1057
    %v1060 = vxor.u32 %v1058, 2147483648
    %v1061 = vxor.u32 %v1059, 2147483648
    %v1062 = vmul.f32 %v1060, 1.442695
    %v1063 = vpow.pop %v1062
    %v1064 = vmul.f32 %v1061, 1.442695
    %v1065 = vpow.pop %v1064
    %v1066 = vadd.f32 %v1063, 1.0
    %v1067 = vadd.f32 %v1065, 1.0
    %v1068 = vrcp.pop %v1066
    %v1069 = vmul.f32 1.0, %v1068
    %v1070 = vrcp.pop %v1067
    %v1071 = vmul.f32 1.0, %v1070
    %1073 = vset.pattern.permute.xlu0 96
    %1074 = vperm.xlu0 %1073, %v1069
    %v1075 = vpop.permute.xlu0 %1074
    %1078 = vset.pattern.permute.xlu0 96
    %1079 = vperm.xlu0 %1078, %v1071
    %v1080 = vpop.permute.xlu0 %1079
    %v1082 = vmul.f32 %v1075, %v44
    %v1083 = vmul.f32 %v1080, %v45
    %1085 = vrot.lane.b32.xlu0 %v356, 64
    %v1086 = vpop.permute.xlu0 %1085
    %1088 = vxpose.xlu0.b32.start [1/16] %v1086, 128
    %1089 = vxpose.xlu0.b32.cont [2/16] 0.0, 128
    %1090 = vxpose.xlu0.b32.cont [3/16] 0.0, 128
    %1091 = vxpose.xlu0.b32.cont [4/16] 0.0, 128
    %1092 = vxpose.xlu0.b32.cont [5/16] 0.0, 128
    %1093 = vxpose.xlu0.b32.cont [6/16] 0.0, 128
    %1094 = vxpose.xlu0.b32.cont [7/16] 0.0, 128
    %1095 = vxpose.xlu0.b32.cont [8/16] 0.0, 128
    %1096 = vxpose.xlu0.b32.cont [9/16] 0.0, 128
    %1097 = vxpose.xlu0.b32.cont [10/16] 0.0, 128
    %1098 = vxpose.xlu0.b32.cont [11/16] 0.0, 128
    %1099 = vxpose.xlu0.b32.cont [12/16] 0.0, 128
    %1100 = vxpose.xlu0.b32.cont [13/16] 0.0, 128
    %1101 = vxpose.xlu0.b32.cont [14/16] 0.0, 128
    %1102 = vxpose.xlu0.b32.cont [15/16] 0.0, 128
    %1103 = vxpose.xlu0.b32.end [16/16] 0.0, 128
    %v1104 = vpop.trf.xlu0
    %v1105 = vpop.trf.xlu0
    %v1106 = vpop.trf.xlu0
    %v1107 = vpop.trf.xlu0
    %v1108 = vpop.trf.xlu0
    %v1109 = vpop.trf.xlu0
    %v1110 = vpop.trf.xlu0
    %v1111 = vpop.trf.xlu0
    %v1112 = vpop.trf.xlu0
    %v1113 = vpop.trf.xlu0
    %v1114 = vpop.trf.xlu0
    %v1115 = vpop.trf.xlu0
    %v1116 = vpop.trf.xlu0
    %v1117 = vpop.trf.xlu0
    %v1118 = vpop.trf.xlu0
    %v1119 = vpop.trf.xlu0
    %v1120 = vsel %vm54, %v1082, 0.0
    %v1121 = vrot.slane %v1120, 4
    %v1122 = vadd.f32 %v1120, %v1121
    %v1123 = vrot.slane %v1122, 2
    %v1124 = vadd.f32 %v1122, %v1123
    %v1125 = vrot.slane %v1124, 1
    %v1126 = vadd.f32 %v1124, %v1125
    %1128 = vset.pattern.permute.xlu0 0
    %1129 = vperm.xlu0 %1128, %v1104
    %v1130 = vpop.permute.xlu0 %1129
    %1133 = vset.pattern.permute.xlu0 0
    %1134 = vperm.xlu0 %1133, %v1105
    %v1135 = vpop.permute.xlu0 %1134
    %1138 = vset.pattern.permute.xlu0 0
    %1139 = vperm.xlu0 %1138, %v1106
    %v1140 = vpop.permute.xlu0 %1139
    %1143 = vset.pattern.permute.xlu0 0
    %1144 = vperm.xlu0 %1143, %v1107
    %v1145 = vpop.permute.xlu0 %1144
    %v1147 = vmul.f32 %v1130, %v1126
    %v1148 = vmul.f32 %v1135, %v1126
    %v1149 = vmul.f32 %v1140, %v1126
    %v1150 = vmul.f32 %v1145, %v1126
    %v1151 = vsel %vm54, %v1083, 0.0
    %v1152 = vrot.slane %v1151, 4
    %v1153 = vadd.f32 %v1151, %v1152
    %v1154 = vrot.slane %v1153, 2
    %v1155 = vadd.f32 %v1153, %v1154
    %v1156 = vrot.slane %v1155, 1
    %v1157 = vadd.f32 %v1155, %v1156
    %1158 = vset.pattern.permute.xlu0 1
    %1159 = vperm.xlu0 %1158, %v1104
    %v1160 = vpop.permute.xlu0 %1159
    %1162 = vset.pattern.permute.xlu0 1
    %1163 = vperm.xlu0 %1162, %v1105
    %v1164 = vpop.permute.xlu0 %1163
    %1166 = vset.pattern.permute.xlu0 1
    %1167 = vperm.xlu0 %1166, %v1106
    %v1168 = vpop.permute.xlu0 %1167
    %1170 = vset.pattern.permute.xlu0 1
    %1171 = vperm.xlu0 %1170, %v1107
    %v1172 = vpop.permute.xlu0 %1171
    %v1174 = vmul.f32 %v1160, %v1157
    %v1175 = vmul.f32 %v1164, %v1157
    %v1176 = vmul.f32 %v1168, %v1157
    %v1177 = vmul.f32 %v1172, %v1157
    %v1178 = vlaneseq
    %v1179 = vshrl.u32 %v1178, 7
    %v1180 = vsub.s32 0, %v1179
    %v1181 = vrot.slane %v33, %v1180
    %1183 = vrot.lane.b32.xlu0 %v1181, 32
    %v1184 = vpop.permute.xlu0 %1183
    %v1186 = vmul.f32 %v46, %v1184
    %v1187 = vmul.f32 %v47, %v1184
    %v1188 = vmul.f32 %v48, %v1184
    %v1189 = vmul.f32 %v49, %v1184
    %v1190 = vmul.f32 %v50, %v1184
    %v1191 = vmul.f32 %v51, %v1184
    %v1192 = vmul.f32 %v52, %v1184
    %v1193 = vmul.f32 %v53, %v1184
    %v1194 = vadd.f32 %v1186, %v1147
    %v1195 = vadd.f32 %v1187, %v1148
    %v1196 = vadd.f32 %v1188, %v1149
    %v1197 = vadd.f32 %v1189, %v1150
    %v1198 = vadd.f32 %v1190, %v1174
    %v1199 = vadd.f32 %v1191, %v1175
    %v1200 = vadd.f32 %v1192, %v1176
    %v1201 = vadd.f32 %v1193, %v1177
    %v1202 = vmul.f32 %v1194, %v1194
    %v1203 = vmul.f32 %v1195, %v1195
    %v1204 = vmul.f32 %v1196, %v1196
    %v1205 = vmul.f32 %v1197, %v1197
    %v1206 = vmul.f32 %v1198, %v1198
    %v1207 = vmul.f32 %v1199, %v1199
    %v1208 = vmul.f32 %v1200, %v1200
    %v1209 = vmul.f32 %v1201, %v1201
    %v1210 = vsel %vm54, %v1202, 0.0
    %1211 = vadd.xlane.f32.xlu0 %v1210
    %v1212 = vpop.xlane.xlu0 %1211
    %v1213 = vsel %vm54, %v1203, 0.0
    %1214 = vadd.xlane.f32.xlu0 %v1213
    %v1215 = vpop.xlane.xlu0 %1214
    %v1216 = vsel %vm54, %v1204, 0.0
    %1217 = vadd.xlane.f32.xlu0 %v1216
    %v1218 = vpop.xlane.xlu0 %1217
    %v1219 = vsel %vm54, %v1205, 0.0
    %1220 = vadd.xlane.f32.xlu0 %v1219
    %v1221 = vpop.xlane.xlu0 %1220
    %v1222 = vsel %vm54, %v1206, 0.0
    %1223 = vadd.xlane.f32.xlu0 %v1222
    %v1224 = vpop.xlane.xlu0 %1223
    %v1225 = vsel %vm54, %v1207, 0.0
    %1226 = vadd.xlane.f32.xlu0 %v1225
    %v1227 = vpop.xlane.xlu0 %1226
    %v1228 = vsel %vm54, %v1208, 0.0
    %1229 = vadd.xlane.f32.xlu0 %v1228
    %v1230 = vpop.xlane.xlu0 %1229
    %v1231 = vsel %vm54, %v1209, 0.0
    %1232 = vadd.xlane.f32.xlu0 %v1231
    %v1233 = vpop.xlane.xlu0 %1232
    %v1234 = vmax.f32 %v1212, 1e-24
    %v1235 = vmax.f32 %v1215, 1e-24
    %v1236 = vmax.f32 %v1218, 1e-24
    %v1237 = vmax.f32 %v1221, 1e-24
    %v1238 = vmax.f32 %v1224, 1e-24
    %v1239 = vmax.f32 %v1227, 1e-24
    %v1240 = vmax.f32 %v1230, 1e-24
    %v1241 = vmax.f32 %v1233, 1e-24
    %v1242 = vrsqrt.pop %v1234
    %v1243 = vrsqrt.pop %v1235
    %v1244 = vrsqrt.pop %v1236
    %v1245 = vrsqrt.pop %v1237
    %v1246 = vrsqrt.pop %v1238
    %v1247 = vrsqrt.pop %v1239
    %v1248 = vrsqrt.pop %v1240
    %v1249 = vrsqrt.pop %v1241
    %v1250 = vmul.f32 %v1194, %v1242
    %v1251 = vmul.f32 %v1195, %v1243
    %v1252 = vmul.f32 %v1196, %v1244
    %v1253 = vmul.f32 %v1197, %v1245
    %v1254 = vmul.f32 %v1198, %v1246
    %v1255 = vmul.f32 %v1199, %v1247
    %v1256 = vmul.f32 %v1200, %v1248
    %v1257 = vmul.f32 %v1201, %v1249
    %v1258 = vmul.f32 %v1250, 5.656854
    %v1259 = vmul.f32 %v1251, 5.656854
    %v1260 = vmul.f32 %v1252, 5.656854
    %v1261 = vmul.f32 %v1253, 5.656854
    %v1262 = vmul.f32 %v1254, 5.656854
    %v1263 = vmul.f32 %v1255, 5.656854
    %v1264 = vmul.f32 %v1256, 5.656854
    %v1265 = vmul.f32 %v1257, 5.656854
    %1266 = vst [vmem:[%s3] sm:$0xff] 0.0
    %1267 = vst [vmem:[%s3 + $0x8] sm:$0xff] 0.0
    %1268 = vst [vmem:[%s3 + $0x10] sm:$0xff] 0.0
    %1269 = vst [vmem:[%s3 + $0x18] sm:$0xff] 0.0
    %1270 = vst [vmem:[%s3 + $0x20] sm:$0xff] 0.0
    %1271 = vst [vmem:[%s3 + $0x28] sm:$0xff] 0.0
    %1272 = vst [vmem:[%s3 + $0x30] sm:$0xff] 0.0
    %1273 = vst [vmem:[%s3 + $0x38] sm:$0xff] 0.0
    %1274 = vst.msk [vmem:[%s3] sm:$0xff] %vm54, %v1258
    %1275 = vst.msk [vmem:[%s3 + $0x8] sm:$0xff] %vm54, %v1259
    %1276 = vst.msk [vmem:[%s3 + $0x10] sm:$0xff] %vm54, %v1260
    %1277 = vst.msk [vmem:[%s3 + $0x18] sm:$0xff] %vm54, %v1261
    %1278 = vst.msk [vmem:[%s3 + $0x20] sm:$0xff] %vm54, %v1262
    %1279 = vst.msk [vmem:[%s3 + $0x28] sm:$0xff] %vm54, %v1263
    %1280 = vst.msk [vmem:[%s3 + $0x30] sm:$0xff] %vm54, %v1264
    %1281 = vst.msk [vmem:[%s3 + $0x38] sm:$0xff] %vm54, %v1265
    %vm1282 = vcmask 523520
    %1283 = vst.msk [vmem:[%s3] sm:$0xff] %vm1282, %v1032
    %1284 = vst.msk [vmem:[%s3 + $0x20] sm:$0xff] %vm1282, %v1033
    %1286 = vrot.lane.b32.xlu0 %v853, 96
    %v1287 = vpop.permute.xlu0 %1286
    %1289 = vrot.lane.b32.xlu0 %v852, 64
    %v1290 = vpop.permute.xlu0 %1289
    %1291 = vrot.lane.b32.xlu0 %v1287, 64
    %v1292 = vpop.permute.xlu0 %1291
    %1295 = vst.msk [vmem:[%s3] sm:$0xff] %vm313, %v1290
    %1296 = vst.msk [vmem:[%s3 + $0x20] sm:$0xff] %vm313, %v1292
    %v1298 = vunpack.c.l.s4 1966171168
    %v1299 = vunpack.c.0.s8 %v1298
    %v1300 = vlaneseq
    %v1301 = vshrl.u32 %v1300, 7
    %v1302 = vsub.s32 %v1299, %v1301
    %v1303 = vrot.slane %v356, %v1302
    %v1304 = vcombine.high %v1303, %v1303
    %v1306 = vunpack.c.l.s4 1966171168
    %v1307 = vunpack.c.0.s8 %v1306
    %v1308 = vlaneseq
    %v1309 = vshrl.u32 %v1308, 7
    %v1310 = vsub.s32 %v1307, %v1309
    %v1311 = vrot.slane %v1303, %v1310
    %v1313 = vunpack.c.l.s4 1966171168
    %v1314 = vunpack.c.0.s8 %v1313
    %v1315 = vlaneseq
    %v1316 = vshrl.u32 %v1315, 7
    %v1317 = vsub.s32 %v1314, %v1316
    %v1318 = vrot.slane %v1304, %v1317
    %v1319 = vlaneseq
    %v1320 = vshrl.u32 %v1319, 7
    %v1321 = vsub.s32 0, %v1320
    %v1322 = vrot.slane %v1311, %v1321
    %v1323 = vlaneseq
    %v1324 = vshrl.u32 %v1323, 7
    %v1325 = vsub.s32 0, %v1324
    %v1326 = vrot.slane %v1318, %v1325
    %1327 = vrot.lane.b32.xlu0 %v1322, 32
    %v1328 = vpop.permute.xlu0 %1327
    %1329 = vrot.lane.b32.xlu0 %v1326, 32
    %v1330 = vpop.permute.xlu0 %1329
    %vm1333 = vcmask 1041152
    %1334 = vst.msk [vmem:[%s3] sm:$0x1] %vm1333, %v1328
    %1335 = vst.msk [vmem:[%s3 + $0x20] sm:$0x1] %vm1333, %v1330
    %vm1336 = vcmask 794368
    %1337 = vst.msk [vmem:[%s3 + $0x1] sm:$0xff] %vm1336, %v1069
    %1338 = vst.msk [vmem:[%s3 + $0x21] sm:$0xff] %vm1336, %v1071
    // Predicated region
    $region18: #{working_memory_forward.1} parent=1 // pred_check
      _
    $region19: #{working_memory_forward.1} parent=1 // pred_check_branch
      %1340 = sbr.rel (0) target = $region21
    $region20: #{working_memory_forward.1} parent=1 // pred_region
      _
    $region21: #{working_memory_forward.1} parent=1 // pred_fallthru
      _
    // Predicated region
    $region22: #{working_memory_forward.1} parent=1 // pred_check
      _
    $region23: #{working_memory_forward.1} parent=1 // pred_check_branch
      %1342 = sbr.rel (0) target = $region25
    $region24: #{working_memory_forward.1} parent=1 // pred_region
      _
    $region25: #{working_memory_forward.1} parent=1 // pred_fallthru
      _
    %1343 = vsyncpa [#allocation3], 1

</llo_original>
